<compile_context>
chip_gen: v7x
topology: tpu7x:2x2x1
jax: 0.10.0
libtpu: 0.0.40
codegen_flags: <defaults>
</compile_context>

<pallas_src>
import functools

import jax
import jax.numpy as jnp
from jax.experimental import pallas as pl
from jax.experimental.pallas import tpu as pltpu

# ----- model hyper-params (mirrors FlowModel.__init__ defaults) -----
HORIZON_STEPS = 4
ACTION_DIM = 8
OBS_DIM = 16
HIDDEN = 128
NUM_INFERENCE_STEPS = 10
FINAL_ACTION_CLIP_VALUE = 1.0   # exercises the torch.clamp branch
BATCH = 2

ACT_FLAT = HORIZON_STEPS * ACTION_DIM   # 32
LARGE_BATCH_TILE = 256                  # rows/tile when B is large (MXU M amortization)


def flow_euler_kernel(x0_ref, state_ref, wx_ref, ws_ref, wt_ref, b1_ref,
                      w2dt_ref, b2dt_ref, out_ref, *, num_steps, clip_value):
    """One batch tile: full Euler integration x += dt * net(x, t, cond), in VMEM.

    Shapes:
      x0   : (bt, 32)  f32      state : (bt, 16)  f32
      wx   : (32, 128) bf16     ws    : (16, 128) bf16
      wt,b1: (1, 128)  f32      w2dt  : (128, 32) bf16  (dt pre-folded)
      b2dt : (1, 32)   f32      (dt pre-folded)
    """
    x = x0_ref[...]
    wx = wx_ref[...]
    w2dt = w2dt_ref[...]
    wt = wt_ref[...]
    b2dt = b2dt_ref[...]

    delta_t = 1.0 / num_steps

    # Loop-invariant: cond projection + first-layer bias (bf16 MXU, f32 accumulate).
    base = jnp.dot(state_ref[...].astype(jnp.bfloat16), ws_ref[...],
                   preferred_element_type=jnp.float32) + b1_ref[...]

    # Fully unrolled Euler loop; `i * delta_t` is a compile-time Python float, so
    # the time bias is one (1,128) VPU scale per step (no iota / table / slices).
    for i in range(num_steps):
        t = i * delta_t
        h = jnp.dot(x.astype(jnp.bfloat16), wx, preferred_element_type=jnp.float32)
        h = jnp.maximum(h + base + t * wt, 0.0)                    # ReLU in f32 (VPU)
        x = x + (jnp.dot(h.astype(jnp.bfloat16), w2dt,
                         preferred_element_type=jnp.float32) + b2dt)

    if clip_value is not None:                                     # torch.clamp
        x = jnp.clip(x, -clip_value, clip_value)

    out_ref[...] = x


def prepare_params(params, num_steps):
    """One-time parameter prep (param-init time, NOT the per-call hot path):
    fold dt into the second layer and cast MXU weight operands to bf16."""
    wx, ws, wt, b1, w2, b2 = params
    dt = jnp.float32(1.0 / num_steps)
    return (wx.astype(jnp.bfloat16),
            ws.astype(jnp.bfloat16),
            wt.astype(jnp.float32),
            b1.astype(jnp.float32),
            (dt * w2).astype(jnp.bfloat16),
            (dt * b2).astype(jnp.float32))


def flow_model_forward(x0, state, prepped,
                       num_steps=NUM_INFERENCE_STEPS,
                       clip_value=FINAL_ACTION_CLIP_VALUE):
    """FlowModel.forward: x0 is the (B, H, A) Gaussian init; returns (B, H, A)."""
    B = x0.shape[0]
    x0_flat = x0.reshape(B, ACT_FLAT).astype(jnp.float32)
    state = state.astype(jnp.float32)

    wx, ws, wt, b1, w2dt, b2dt = prepped

    # Batch tiling: one tile for small B; 256-row tiles for large B so the MXU M
    # dim is filled and v7x's two TensorCores each get >=1 tile (even counts).
    if B <= LARGE_BATCH_TILE:
        bt, n_tiles = B, 1
    else:
        bt = LARGE_BATCH_TILE
        n_tiles = pl.cdiv(B, bt)
    B_pad = n_tiles * bt
    if B_pad != B:
        x0_flat = jnp.pad(x0_flat, ((0, B_pad - B), (0, 0)))
        state = jnp.pad(state, ((0, B_pad - B), (0, 0)))

    kernel = functools.partial(flow_euler_kernel,
                               num_steps=num_steps, clip_value=clip_value)

    # x/state/out tile over the batch grid; weights use a constant block index so
    # they stay VMEM-resident across the whole grid. Last dims (32/16/128) equal
    # the full array extent, so the blocks are legal without lane padding.
    def batch_spec(cols):
        return pl.BlockSpec((bt, cols), lambda b: (b, 0))

    def const_spec(rows, cols):
        return pl.BlockSpec((rows, cols), lambda b: (0, 0))

    flops = int(B_pad) * (2 * num_steps * (ACT_FLAT * HIDDEN + HIDDEN * ACT_FLAT)
                          + 2 * OBS_DIM * HIDDEN)
    bytes_accessed = (4 * B_pad * (2 * ACT_FLAT + OBS_DIM)
                      + 2 * (ACT_FLAT * HIDDEN + OBS_DIM * HIDDEN + HIDDEN * ACT_FLAT)
                      + 4 * (2 * HIDDEN + ACT_FLAT))

    out = pl.pallas_call(
        kernel,
        out_shape=jax.ShapeDtypeStruct((B_pad, ACT_FLAT), jnp.float32),
        grid_spec=pltpu.PrefetchScalarGridSpec(
            num_scalar_prefetch=0,
            grid=(n_tiles,),
            in_specs=[
                batch_spec(ACT_FLAT),          # x0
                batch_spec(OBS_DIM),           # state
                const_spec(ACT_FLAT, HIDDEN),  # wx    (bf16)
                const_spec(OBS_DIM, HIDDEN),   # ws    (bf16)
                const_spec(1, HIDDEN),         # wt    (f32)
                const_spec(1, HIDDEN),         # b1    (f32)
                const_spec(HIDDEN, ACT_FLAT),  # w2*dt (bf16)
                const_spec(1, ACT_FLAT),       # b2*dt (f32)
            ],
            out_specs=pl.BlockSpec((bt, ACT_FLAT), lambda b: (b, 0)),
        ),
        compiler_params=pltpu.CompilerParams(
            dimension_semantics=("parallel",)),
        cost_estimate=pl.CostEstimate(
            flops=flops, transcendentals=0, bytes_accessed=bytes_accessed),
    )(x0_flat, state, wx, ws, wt, b1, w2dt, b2dt)

    if B_pad != B:
        out = out[:B]
    return out.reshape(B, HORIZON_STEPS, ACTION_DIM)


def init_params(key):
    """Deterministic synthetic weights for the velocity MLP."""
    k1, k2, k3, k4 = jax.random.split(key, 4)
    wx = jax.random.normal(k1, (ACT_FLAT, HIDDEN), jnp.float32) * 0.05
    ws = jax.random.normal(k2, (OBS_DIM, HIDDEN), jnp.float32) * 0.05
    wt = jax.random.normal(k3, (1, HIDDEN), jnp.float32) * 0.05
    b1 = jnp.zeros((1, HIDDEN), jnp.float32)
    w2 = jax.random.normal(k4, (HIDDEN, ACT_FLAT), jnp.float32) * 0.05
    b2 = jnp.zeros((1, ACT_FLAT), jnp.float32)
    return wx, ws, wt, b1, w2, b2


def reference_forward(x0, state, params, num_steps, clip_value):
    """Pure-JAX f32 reference of the FlowModel.forward semantics."""
    wx, ws, wt, b1, w2, b2 = params
    x = x0.reshape(x0.shape[0], ACT_FLAT)
    dt = 1.0 / num_steps
    t = 0.0
    for _ in range(num_steps):
        h = jnp.maximum(x @ wx + state @ ws + t * wt + b1, 0.0)
        v = h @ w2 + b2
        x = x + dt * v
        t += dt
    if clip_value is not None:
        x = jnp.clip(x, -clip_value, clip_value)
    return x.reshape(x0.shape)


if __name__ == "__main__":
    key = jax.random.PRNGKey(0)
    k_params, k_noise, k_state = jax.random.split(key, 3)

    params = init_params(k_params)
    # One-time prep (analogous to weight loading in FlowModel.__init__): dt fold + bf16 cast.
    prepped = prepare_params(params, NUM_INFERENCE_STEPS)

    # cond['state'] analog
    state = jax.random.normal(k_state, (BATCH, OBS_DIM), jnp.float32)
    # torch.randn((B, horizon_steps, action_dim)) analog (deterministic here)
    # TODO(synk): the spec's `network` is abstract; a synthetic 2-layer MLP velocity
    # net stands in for it (forward-pass structure is otherwise identical).
    x0 = jax.random.normal(k_noise, (BATCH, HORIZON_STEPS, ACTION_DIM), jnp.float32)

    trajectories = flow_model_forward(x0, state, prepped)
    trajectories = jax.block_until_ready(trajectories)

    ref = reference_forward(x0, state, params,
                            NUM_INFERENCE_STEPS, FINAL_ACTION_CLIP_VALUE)
    assert trajectories.shape == (BATCH, HORIZON_STEPS, ACTION_DIM)
    # bf16 MXU operands => compare to the pure-f32 reference at a loosened tolerance.
    assert jnp.allclose(trajectories, ref, atol=1e-2, rtol=1e-2)

    # Sample namedtuple analog: (trajectories, chains=None)
    sample = (trajectories, None)
    del sample

    print("KERNEL_OK")
</pallas_src>

<mosaic_0001>
module attributes {stable_mosaic.version = 11 : i64} {
  func.func @flow_euler_kernel(%arg0: i32, %arg1: memref<2x32xf32, #tpu.memory_space<vmem>>, %arg2: memref<2x16xf32, #tpu.memory_space<vmem>>, %arg3: memref<32x128xbf16, #tpu.memory_space<vmem>>, %arg4: memref<16x128xbf16, #tpu.memory_space<vmem>>, %arg5: memref<1x128xf32, #tpu.memory_space<vmem>>, %arg6: memref<1x128xf32, #tpu.memory_space<vmem>>, %arg7: memref<128x32xbf16, #tpu.memory_space<vmem>>, %arg8: memref<1x32xf32, #tpu.memory_space<vmem>>, %arg9: memref<2x32xf32, #tpu.memory_space<vmem>>) attributes {dimension_semantics = [#tpu.dimension_semantics<parallel>], iteration_bounds = array<i64: 1>, scalar_prefetch = 0 : i64, scratch_operands = 0 : i64, tpu.core_type = #tpu.core_type<tc>, window_params = [{transform_indices = @transform_0, window_bounds = array<i64: 2, 32>}, {transform_indices = @transform_1, window_bounds = array<i64: 2, 16>}, {pipeline_mode = #tpu.pipeline_mode<synchronous>, transform_indices = @transform_2, window_bounds = array<i64: 32, 128>}, {pipeline_mode = #tpu.pipeline_mode<synchronous>, transform_indices = @transform_3, window_bounds = array<i64: 16, 128>}, {pipeline_mode = #tpu.pipeline_mode<synchronous>, transform_indices = @transform_4, window_bounds = array<i64: 1, 128>}, {pipeline_mode = #tpu.pipeline_mode<synchronous>, transform_indices = @transform_5, window_bounds = array<i64: 1, 128>}, {pipeline_mode = #tpu.pipeline_mode<synchronous>, transform_indices = @transform_6, window_bounds = array<i64: 128, 32>}, {pipeline_mode = #tpu.pipeline_mode<synchronous>, transform_indices = @transform_7, window_bounds = array<i64: 1, 32>}, {transform_indices = @transform_8, window_bounds = array<i64: 2, 32>}]} {
    %c0 = arith.constant 0 : index
    %c0_0 = arith.constant 0 : index
    %0 = vector.load %arg1[%c0, %c0_0] : memref<2x32xf32, #tpu.memory_space<vmem>>, vector<2x32xf32>
    %c0_1 = arith.constant 0 : index
    %c0_2 = arith.constant 0 : index
    %1 = vector.load %arg3[%c0_1, %c0_2] : memref<32x128xbf16, #tpu.memory_space<vmem>>, vector<32x128xbf16>
    %c0_3 = arith.constant 0 : index
    %c0_4 = arith.constant 0 : index
    %2 = vector.load %arg7[%c0_3, %c0_4] : memref<128x32xbf16, #tpu.memory_space<vmem>>, vector<128x32xbf16>
    %c0_5 = arith.constant 0 : index
    %c0_6 = arith.constant 0 : index
    %3 = vector.load %arg5[%c0_5, %c0_6] : memref<1x128xf32, #tpu.memory_space<vmem>>, vector<1x128xf32>
    %c0_7 = arith.constant 0 : index
    %c0_8 = arith.constant 0 : index
    %4 = vector.load %arg8[%c0_7, %c0_8] : memref<1x32xf32, #tpu.memory_space<vmem>>, vector<1x32xf32>
    %c0_9 = arith.constant 0 : index
    %c0_10 = arith.constant 0 : index
    %5 = vector.load %arg2[%c0_9, %c0_10] : memref<2x16xf32, #tpu.memory_space<vmem>>, vector<2x16xf32>
    %6 = arith.truncf %5 : vector<2x16xf32> to vector<2x16xbf16>
    %c0_11 = arith.constant 0 : index
    %c0_12 = arith.constant 0 : index
    %7 = vector.load %arg4[%c0_11, %c0_12] : memref<16x128xbf16, #tpu.memory_space<vmem>>, vector<16x128xbf16>
    %cst = arith.constant dense<0.000000e+00> : vector<2x128xf32>
    %8 = tpu.matmul %6, %7, %cst {dimension_numbers = #tpu.dot_dimension_numbers<[1], [0], [0], [1], [0, 0, 1, 1], [], []>} : vector<2x16xbf16>, vector<16x128xbf16>, vector<2x128xf32> -> vector<2x128xf32>
    %c0_13 = arith.constant 0 : index
    %c0_14 = arith.constant 0 : index
    %9 = vector.load %arg6[%c0_13, %c0_14] : memref<1x128xf32, #tpu.memory_space<vmem>>, vector<1x128xf32>
    %10 = vector.broadcast %9 : vector<1x128xf32> to vector<2x128xf32>
    %11 = arith.addf %8, %10 : vector<2x128xf32>
    %12 = arith.truncf %0 : vector<2x32xf32> to vector<2x32xbf16>
    %cst_15 = arith.constant dense<0.000000e+00> : vector<2x128xf32>
    %13 = tpu.matmul %12, %1, %cst_15 {dimension_numbers = #tpu.dot_dimension_numbers<[1], [0], [0], [1], [0, 0, 1, 1], [], []>} : vector<2x32xbf16>, vector<32x128xbf16>, vector<2x128xf32> -> vector<2x128xf32>
    %14 = arith.addf %13, %11 : vector<2x128xf32>
    %cst_16 = arith.constant 0.000000e+00 : f32
    %15 = vector.broadcast %cst_16 : f32 to vector<1x128xf32>
    %16 = arith.mulf %15, %3 : vector<1x128xf32>
    %17 = vector.broadcast %16 : vector<1x128xf32> to vector<2x128xf32>
    %18 = arith.addf %14, %17 : vector<2x128xf32>
    %cst_17 = arith.constant 0.000000e+00 : f32
    %19 = vector.broadcast %cst_17 : f32 to vector<2x128xf32>
    %20 = arith.maximumf %18, %19 : vector<2x128xf32>
    %21 = arith.truncf %20 : vector<2x128xf32> to vector<2x128xbf16>
    %cst_18 = arith.constant dense<0.000000e+00> : vector<2x32xf32>
    %22 = tpu.matmul %21, %2, %cst_18 {dimension_numbers = #tpu.dot_dimension_numbers<[1], [0], [0], [1], [0, 0, 1, 1], [], []>} : vector<2x128xbf16>, vector<128x32xbf16>, vector<2x32xf32> -> vector<2x32xf32>
    %23 = vector.broadcast %4 : vector<1x32xf32> to vector<2x32xf32>
    %24 = arith.addf %22, %23 : vector<2x32xf32>
    %25 = arith.addf %0, %24 : vector<2x32xf32>
    %26 = arith.truncf %25 : vector<2x32xf32> to vector<2x32xbf16>
    %cst_19 = arith.constant dense<0.000000e+00> : vector<2x128xf32>
    %27 = tpu.matmul %26, %1, %cst_19 {dimension_numbers = #tpu.dot_dimension_numbers<[1], [0], [0], [1], [0, 0, 1, 1], [], []>} : vector<2x32xbf16>, vector<32x128xbf16>, vector<2x128xf32> -> vector<2x128xf32>
    %28 = arith.addf %27, %11 : vector<2x128xf32>
    %cst_20 = arith.constant 1.000000e-01 : f32
    %29 = vector.broadcast %cst_20 : f32 to vector<1x128xf32>
    %30 = arith.mulf %29, %3 : vector<1x128xf32>
    %31 = vector.broadcast %30 : vector<1x128xf32> to vector<2x128xf32>
    %32 = arith.addf %28, %31 : vector<2x128xf32>
    %cst_21 = arith.constant 0.000000e+00 : f32
    %33 = vector.broadcast %cst_21 : f32 to vector<2x128xf32>
    %34 = arith.maximumf %32, %33 : vector<2x128xf32>
    %35 = arith.truncf %34 : vector<2x128xf32> to vector<2x128xbf16>
    %cst_22 = arith.constant dense<0.000000e+00> : vector<2x32xf32>
    %36 = tpu.matmul %35, %2, %cst_22 {dimension_numbers = #tpu.dot_dimension_numbers<[1], [0], [0], [1], [0, 0, 1, 1], [], []>} : vector<2x128xbf16>, vector<128x32xbf16>, vector<2x32xf32> -> vector<2x32xf32>
    %37 = vector.broadcast %4 : vector<1x32xf32> to vector<2x32xf32>
    %38 = arith.addf %36, %37 : vector<2x32xf32>
    %39 = arith.addf %25, %38 : vector<2x32xf32>
    %40 = arith.truncf %39 : vector<2x32xf32> to vector<2x32xbf16>
    %cst_23 = arith.constant dense<0.000000e+00> : vector<2x128xf32>
    %41 = tpu.matmul %40, %1, %cst_23 {dimension_numbers = #tpu.dot_dimension_numbers<[1], [0], [0], [1], [0, 0, 1, 1], [], []>} : vector<2x32xbf16>, vector<32x128xbf16>, vector<2x128xf32> -> vector<2x128xf32>
    %42 = arith.addf %41, %11 : vector<2x128xf32>
    %cst_24 = arith.constant 2.000000e-01 : f32
    %43 = vector.broadcast %cst_24 : f32 to vector<1x128xf32>
    %44 = arith.mulf %43, %3 : vector<1x128xf32>
    %45 = vector.broadcast %44 : vector<1x128xf32> to vector<2x128xf32>
    %46 = arith.addf %42, %45 : vector<2x128xf32>
    %cst_25 = arith.constant 0.000000e+00 : f32
    %47 = vector.broadcast %cst_25 : f32 to vector<2x128xf32>
    %48 = arith.maximumf %46, %47 : vector<2x128xf32>
    %49 = arith.truncf %48 : vector<2x128xf32> to vector<2x128xbf16>
    %cst_26 = arith.constant dense<0.000000e+00> : vector<2x32xf32>
    %50 = tpu.matmul %49, %2, %cst_26 {dimension_numbers = #tpu.dot_dimension_numbers<[1], [0], [0], [1], [0, 0, 1, 1], [], []>} : vector<2x128xbf16>, vector<128x32xbf16>, vector<2x32xf32> -> vector<2x32xf32>
    %51 = vector.broadcast %4 : vector<1x32xf32> to vector<2x32xf32>
    %52 = arith.addf %50, %51 : vector<2x32xf32>
    %53 = arith.addf %39, %52 : vector<2x32xf32>
    %54 = arith.truncf %53 : vector<2x32xf32> to vector<2x32xbf16>
    %cst_27 = arith.constant dense<0.000000e+00> : vector<2x128xf32>
    %55 = tpu.matmul %54, %1, %cst_27 {dimension_numbers = #tpu.dot_dimension_numbers<[1], [0], [0], [1], [0, 0, 1, 1], [], []>} : vector<2x32xbf16>, vector<32x128xbf16>, vector<2x128xf32> -> vector<2x128xf32>
    %56 = arith.addf %55, %11 : vector<2x128xf32>
    %cst_28 = arith.constant 3.000000e-01 : f32
    %57 = vector.broadcast %cst_28 : f32 to vector<1x128xf32>
    %58 = arith.mulf %57, %3 : vector<1x128xf32>
    %59 = vector.broadcast %58 : vector<1x128xf32> to vector<2x128xf32>
    %60 = arith.addf %56, %59 : vector<2x128xf32>
    %cst_29 = arith.constant 0.000000e+00 : f32
    %61 = vector.broadcast %cst_29 : f32 to vector<2x128xf32>
    %62 = arith.maximumf %60, %61 : vector<2x128xf32>
    %63 = arith.truncf %62 : vector<2x128xf32> to vector<2x128xbf16>
    %cst_30 = arith.constant dense<0.000000e+00> : vector<2x32xf32>
    %64 = tpu.matmul %63, %2, %cst_30 {dimension_numbers = #tpu.dot_dimension_numbers<[1], [0], [0], [1], [0, 0, 1, 1], [], []>} : vector<2x128xbf16>, vector<128x32xbf16>, vector<2x32xf32> -> vector<2x32xf32>
    %65 = vector.broadcast %4 : vector<1x32xf32> to vector<2x32xf32>
    %66 = arith.addf %64, %65 : vector<2x32xf32>
    %67 = arith.addf %53, %66 : vector<2x32xf32>
    %68 = arith.truncf %67 : vector<2x32xf32> to vector<2x32xbf16>
    %cst_31 = arith.constant dense<0.000000e+00> : vector<2x128xf32>
    %69 = tpu.matmul %68, %1, %cst_31 {dimension_numbers = #tpu.dot_dimension_numbers<[1], [0], [0], [1], [0, 0, 1, 1], [], []>} : vector<2x32xbf16>, vector<32x128xbf16>, vector<2x128xf32> -> vector<2x128xf32>
    %70 = arith.addf %69, %11 : vector<2x128xf32>
    %cst_32 = arith.constant 4.000000e-01 : f32
    %71 = vector.broadcast %cst_32 : f32 to vector<1x128xf32>
    %72 = arith.mulf %71, %3 : vector<1x128xf32>
    %73 = vector.broadcast %72 : vector<1x128xf32> to vector<2x128xf32>
    %74 = arith.addf %70, %73 : vector<2x128xf32>
    %cst_33 = arith.constant 0.000000e+00 : f32
    %75 = vector.broadcast %cst_33 : f32 to vector<2x128xf32>
    %76 = arith.maximumf %74, %75 : vector<2x128xf32>
    %77 = arith.truncf %76 : vector<2x128xf32> to vector<2x128xbf16>
    %cst_34 = arith.constant dense<0.000000e+00> : vector<2x32xf32>
    %78 = tpu.matmul %77, %2, %cst_34 {dimension_numbers = #tpu.dot_dimension_numbers<[1], [0], [0], [1], [0, 0, 1, 1], [], []>} : vector<2x128xbf16>, vector<128x32xbf16>, vector<2x32xf32> -> vector<2x32xf32>
    %79 = vector.broadcast %4 : vector<1x32xf32> to vector<2x32xf32>
    %80 = arith.addf %78, %79 : vector<2x32xf32>
    %81 = arith.addf %67, %80 : vector<2x32xf32>
    %82 = arith.truncf %81 : vector<2x32xf32> to vector<2x32xbf16>
    %cst_35 = arith.constant dense<0.000000e+00> : vector<2x128xf32>
    %83 = tpu.matmul %82, %1, %cst_35 {dimension_numbers = #tpu.dot_dimension_numbers<[1], [0], [0], [1], [0, 0, 1, 1], [], []>} : vector<2x32xbf16>, vector<32x128xbf16>, vector<2x128xf32> -> vector<2x128xf32>
    %84 = arith.addf %83, %11 : vector<2x128xf32>
    %cst_36 = arith.constant 5.000000e-01 : f32
    %85 = vector.broadcast %cst_36 : f32 to vector<1x128xf32>
    %86 = arith.mulf %85, %3 : vector<1x128xf32>
    %87 = vector.broadcast %86 : vector<1x128xf32> to vector<2x128xf32>
    %88 = arith.addf %84, %87 : vector<2x128xf32>
    %cst_37 = arith.constant 0.000000e+00 : f32
    %89 = vector.broadcast %cst_37 : f32 to vector<2x128xf32>
    %90 = arith.maximumf %88, %89 : vector<2x128xf32>
    %91 = arith.truncf %90 : vector<2x128xf32> to vector<2x128xbf16>
    %cst_38 = arith.constant dense<0.000000e+00> : vector<2x32xf32>
    %92 = tpu.matmul %91, %2, %cst_38 {dimension_numbers = #tpu.dot_dimension_numbers<[1], [0], [0], [1], [0, 0, 1, 1], [], []>} : vector<2x128xbf16>, vector<128x32xbf16>, vector<2x32xf32> -> vector<2x32xf32>
    %93 = vector.broadcast %4 : vector<1x32xf32> to vector<2x32xf32>
    %94 = arith.addf %92, %93 : vector<2x32xf32>
    %95 = arith.addf %81, %94 : vector<2x32xf32>
    %96 = arith.truncf %95 : vector<2x32xf32> to vector<2x32xbf16>
    %cst_39 = arith.constant dense<0.000000e+00> : vector<2x128xf32>
    %97 = tpu.matmul %96, %1, %cst_39 {dimension_numbers = #tpu.dot_dimension_numbers<[1], [0], [0], [1], [0, 0, 1, 1], [], []>} : vector<2x32xbf16>, vector<32x128xbf16>, vector<2x128xf32> -> vector<2x128xf32>
    %98 = arith.addf %97, %11 : vector<2x128xf32>
    %cst_40 = arith.constant 6.000000e-01 : f32
    %99 = vector.broadcast %cst_40 : f32 to vector<1x128xf32>
    %100 = arith.mulf %99, %3 : vector<1x128xf32>
    %101 = vector.broadcast %100 : vector<1x128xf32> to vector<2x128xf32>
    %102 = arith.addf %98, %101 : vector<2x128xf32>
    %cst_41 = arith.constant 0.000000e+00 : f32
    %103 = vector.broadcast %cst_41 : f32 to vector<2x128xf32>
    %104 = arith.maximumf %102, %103 : vector<2x128xf32>
    %105 = arith.truncf %104 : vector<2x128xf32> to vector<2x128xbf16>
    %cst_42 = arith.constant dense<0.000000e+00> : vector<2x32xf32>
    %106 = tpu.matmul %105, %2, %cst_42 {dimension_numbers = #tpu.dot_dimension_numbers<[1], [0], [0], [1], [0, 0, 1, 1], [], []>} : vector<2x128xbf16>, vector<128x32xbf16>, vector<2x32xf32> -> vector<2x32xf32>
    %107 = vector.broadcast %4 : vector<1x32xf32> to vector<2x32xf32>
    %108 = arith.addf %106, %107 : vector<2x32xf32>
    %109 = arith.addf %95, %108 : vector<2x32xf32>
    %110 = arith.truncf %109 : vector<2x32xf32> to vector<2x32xbf16>
    %cst_43 = arith.constant dense<0.000000e+00> : vector<2x128xf32>
    %111 = tpu.matmul %110, %1, %cst_43 {dimension_numbers = #tpu.dot_dimension_numbers<[1], [0], [0], [1], [0, 0, 1, 1], [], []>} : vector<2x32xbf16>, vector<32x128xbf16>, vector<2x128xf32> -> vector<2x128xf32>
    %112 = arith.addf %111, %11 : vector<2x128xf32>
    %cst_44 = arith.constant 0.699999988 : f32
    %113 = vector.broadcast %cst_44 : f32 to vector<1x128xf32>
    %114 = arith.mulf %113, %3 : vector<1x128xf32>
    %115 = vector.broadcast %114 : vector<1x128xf32> to vector<2x128xf32>
    %116 = arith.addf %112, %115 : vector<2x128xf32>
    %cst_45 = arith.constant 0.000000e+00 : f32
    %117 = vector.broadcast %cst_45 : f32 to vector<2x128xf32>
    %118 = arith.maximumf %116, %117 : vector<2x128xf32>
    %119 = arith.truncf %118 : vector<2x128xf32> to vector<2x128xbf16>
    %cst_46 = arith.constant dense<0.000000e+00> : vector<2x32xf32>
    %120 = tpu.matmul %119, %2, %cst_46 {dimension_numbers = #tpu.dot_dimension_numbers<[1], [0], [0], [1], [0, 0, 1, 1], [], []>} : vector<2x128xbf16>, vector<128x32xbf16>, vector<2x32xf32> -> vector<2x32xf32>
    %121 = vector.broadcast %4 : vector<1x32xf32> to vector<2x32xf32>
    %122 = arith.addf %120, %121 : vector<2x32xf32>
    %123 = arith.addf %109, %122 : vector<2x32xf32>
    %124 = arith.truncf %123 : vector<2x32xf32> to vector<2x32xbf16>
    %cst_47 = arith.constant dense<0.000000e+00> : vector<2x128xf32>
    %125 = tpu.matmul %124, %1, %cst_47 {dimension_numbers = #tpu.dot_dimension_numbers<[1], [0], [0], [1], [0, 0, 1, 1], [], []>} : vector<2x32xbf16>, vector<32x128xbf16>, vector<2x128xf32> -> vector<2x128xf32>
    %126 = arith.addf %125, %11 : vector<2x128xf32>
    %cst_48 = arith.constant 8.000000e-01 : f32
    %127 = vector.broadcast %cst_48 : f32 to vector<1x128xf32>
    %128 = arith.mulf %127, %3 : vector<1x128xf32>
    %129 = vector.broadcast %128 : vector<1x128xf32> to vector<2x128xf32>
    %130 = arith.addf %126, %129 : vector<2x128xf32>
    %cst_49 = arith.constant 0.000000e+00 : f32
    %131 = vector.broadcast %cst_49 : f32 to vector<2x128xf32>
    %132 = arith.maximumf %130, %131 : vector<2x128xf32>
    %133 = arith.truncf %132 : vector<2x128xf32> to vector<2x128xbf16>
    %cst_50 = arith.constant dense<0.000000e+00> : vector<2x32xf32>
    %134 = tpu.matmul %133, %2, %cst_50 {dimension_numbers = #tpu.dot_dimension_numbers<[1], [0], [0], [1], [0, 0, 1, 1], [], []>} : vector<2x128xbf16>, vector<128x32xbf16>, vector<2x32xf32> -> vector<2x32xf32>
    %135 = vector.broadcast %4 : vector<1x32xf32> to vector<2x32xf32>
    %136 = arith.addf %134, %135 : vector<2x32xf32>
    %137 = arith.addf %123, %136 : vector<2x32xf32>
    %138 = arith.truncf %137 : vector<2x32xf32> to vector<2x32xbf16>
    %cst_51 = arith.constant dense<0.000000e+00> : vector<2x128xf32>
    %139 = tpu.matmul %138, %1, %cst_51 {dimension_numbers = #tpu.dot_dimension_numbers<[1], [0], [0], [1], [0, 0, 1, 1], [], []>} : vector<2x32xbf16>, vector<32x128xbf16>, vector<2x128xf32> -> vector<2x128xf32>
    %140 = arith.addf %139, %11 : vector<2x128xf32>
    %cst_52 = arith.constant 0.899999976 : f32
    %141 = vector.broadcast %cst_52 : f32 to vector<1x128xf32>
    %142 = arith.mulf %141, %3 : vector<1x128xf32>
    %143 = vector.broadcast %142 : vector<1x128xf32> to vector<2x128xf32>
    %144 = arith.addf %140, %143 : vector<2x128xf32>
    %cst_53 = arith.constant 0.000000e+00 : f32
    %145 = vector.broadcast %cst_53 : f32 to vector<2x128xf32>
    %146 = arith.maximumf %144, %145 : vector<2x128xf32>
    %147 = arith.truncf %146 : vector<2x128xf32> to vector<2x128xbf16>
    %cst_54 = arith.constant dense<0.000000e+00> : vector<2x32xf32>
    %148 = tpu.matmul %147, %2, %cst_54 {dimension_numbers = #tpu.dot_dimension_numbers<[1], [0], [0], [1], [0, 0, 1, 1], [], []>} : vector<2x128xbf16>, vector<128x32xbf16>, vector<2x32xf32> -> vector<2x32xf32>
    %149 = vector.broadcast %4 : vector<1x32xf32> to vector<2x32xf32>
    %150 = arith.addf %148, %149 : vector<2x32xf32>
    %151 = arith.addf %137, %150 : vector<2x32xf32>
    %cst_55 = arith.constant -1.000000e+00 : f32
    %cst_56 = arith.constant 1.000000e+00 : f32
    %152 = vector.broadcast %cst_55 : f32 to vector<2x32xf32>
    %153 = arith.maximumf %152, %151 : vector<2x32xf32>
    %154 = vector.broadcast %cst_56 : f32 to vector<2x32xf32>
    %155 = arith.minimumf %154, %153 : vector<2x32xf32>
    %c0_57 = arith.constant 0 : index
    %c0_58 = arith.constant 0 : index
    %156 = vector.load %arg9[%c0_57, %c0_58] : memref<2x32xf32, #tpu.memory_space<vmem>>, vector<2x32xf32>
    tpu.vector_store %arg9[%c0_57, %c0_58], %155 {strides = array<i32>} : memref<2x32xf32, #tpu.memory_space<vmem>>, vector<2x32xf32>,
    return
  }
  func.func @transform_0(%arg0: i32) -> (i32, i32) {
    %c0_i32 = arith.constant 0 : i32
    %c0_i32_0 = arith.constant 0 : i32
    return %arg0, %c0_i32 : i32, i32
  }
  func.func @transform_1(%arg0: i32) -> (i32, i32) {
    %c0_i32 = arith.constant 0 : i32
    %c0_i32_0 = arith.constant 0 : i32
    return %arg0, %c0_i32 : i32, i32
  }
  func.func @transform_2(%arg0: i32) -> (i32, i32) {
    %c0_i32 = arith.constant 0 : i32
    %c0_i32_0 = arith.constant 0 : i32
    %c0_i32_1 = arith.constant 0 : i32
    return %c0_i32, %c0_i32_0 : i32, i32
  }
  func.func @transform_3(%arg0: i32) -> (i32, i32) {
    %c0_i32 = arith.constant 0 : i32
    %c0_i32_0 = arith.constant 0 : i32
    %c0_i32_1 = arith.constant 0 : i32
    return %c0_i32, %c0_i32_0 : i32, i32
  }
  func.func @transform_4(%arg0: i32) -> (i32, i32) {
    %c0_i32 = arith.constant 0 : i32
    %c0_i32_0 = arith.constant 0 : i32
    %c0_i32_1 = arith.constant 0 : i32
    return %c0_i32, %c0_i32_0 : i32, i32
  }
  func.func @transform_5(%arg0: i32) -> (i32, i32) {
    %c0_i32 = arith.constant 0 : i32
    %c0_i32_0 = arith.constant 0 : i32
    %c0_i32_1 = arith.constant 0 : i32
    return %c0_i32, %c0_i32_0 : i32, i32
  }
  func.func @transform_6(%arg0: i32) -> (i32, i32) {
    %c0_i32 = arith.constant 0 : i32
    %c0_i32_0 = arith.constant 0 : i32
    %c0_i32_1 = arith.constant 0 : i32
    return %c0_i32, %c0_i32_0 : i32, i32
  }
  func.func @transform_7(%arg0: i32) -> (i32, i32) {
    %c0_i32 = arith.constant 0 : i32
    %c0_i32_0 = arith.constant 0 : i32
    %c0_i32_1 = arith.constant 0 : i32
    return %c0_i32, %c0_i32_0 : i32, i32
  }
  func.func @transform_8(%arg0: i32) -> (i32, i32) {
    %c0_i32 = arith.constant 0 : i32
    %c0_i32_0 = arith.constant 0 : i32
    return %arg0, %c0_i32 : i32, i32
  }
}

</mosaic_0001>

<llo_original>
// kernel: tpu_custom_call.1
$region0: #{tpu_custom_call.1}
  #allocation0 [shape = 'u32[]', space=smem, size = 0x4, offset = 0x4, fixed_abs, tag = 'smem constant byte address 0x4 - core index']
  #allocation1 [shape = 'u32[144,128]{1,0:T(1,128)}', space=vmem, size = 0x12000, scoped, tag = 'internal scratch']
  %s0 = inlined_call_operand.vmem [shape: f32[2,32], index: 0, kind: input, shape index: {}]
  %s1 = inlined_call_operand.vmem [shape: f32[2,16], index: 1, kind: input, shape index: {}]
  %s2 = inlined_call_operand.vmem [shape: bf16[32,128], index: 2, kind: input, shape index: {}]
  %s3 = inlined_call_operand.vmem [shape: bf16[16,128], index: 3, kind: input, shape index: {}]
  %s4 = inlined_call_operand.vmem [shape: f32[1,128], index: 4, kind: input, shape index: {}]
  %s5 = inlined_call_operand.vmem [shape: f32[1,128], index: 5, kind: input, shape index: {}]
  %s6 = inlined_call_operand.vmem [shape: bf16[128,32], index: 6, kind: input, shape index: {}]
  %s7 = inlined_call_operand.vmem [shape: f32[1,32], index: 7, kind: input, shape index: {}]
  %s8 = inlined_call_operand.hbm [shape: f32[2,32], index: 8, kind: output, shape index: {}]
  %s9 = sld [smem:[#allocation0]]
  $region42: #{tpu_custom_call.1} parent=0
    _
  %s11 = ssub.s32 1, %s9
  %s12 = scalar_select 0, %s11, %s9
  $region1: #{tpu_custom_call.1} parent=0
    #allocation2 [shape = 'u8[1024]{0}', space=vmem, size = 0x400, scoped, tag = 'output window, operand 0, single buffered']
    #allocation3 [shape = 's32[1]{0}', space=sflag, size = 0x4, scoped, tag = 'scoped memory for tpu_custom_call.1']
    %13 = vsyncpa [#allocation3], 0
    // Predicated region
    $region2: #{tpu_custom_call.1} parent=1 // pred_check
      _
    $region3: #{tpu_custom_call.1} parent=1 // pred_check_branch
      %15 = sbr.rel (0) target = $region5
    $region4: #{tpu_custom_call.1} parent=1 // pred_region
      _
    $region5: #{tpu_custom_call.1} parent=1 // pred_fallthru
      _
    // Predicated region
    $region6: #{tpu_custom_call.1} parent=1 // pred_check
      _
    $region7: #{tpu_custom_call.1} parent=1 // pred_check_branch
      %17 = sbr.rel (0) target = $region9
    $region8: #{tpu_custom_call.1} parent=1 // pred_region
      _
    $region9: #{tpu_custom_call.1} parent=1 // pred_fallthru
      _
    // Predicated region
    $region10: #{tpu_custom_call.1} parent=1 // pred_check
      _
    $region11: #{tpu_custom_call.1} parent=1 // pred_check_branch
      %19 = sbr.rel (0) target = $region13
    $region12: #{tpu_custom_call.1} parent=1 // pred_region
      _
    $region13: #{tpu_custom_call.1} parent=1 // pred_fallthru
      _
    // Predicated region
    $region14: #{tpu_custom_call.1} parent=1 // pred_check
      _
    $region15: #{tpu_custom_call.1} parent=1 // pred_check_branch
      %21 = sbr.rel (0) target = $region17
    $region16: #{tpu_custom_call.1} parent=1 // pred_region
      _
    $region17: #{tpu_custom_call.1} parent=1 // pred_fallthru
      _
    // Predicated region
    $region18: #{tpu_custom_call.1} parent=1 // pred_check
      _
    $region19: #{tpu_custom_call.1} parent=1 // pred_check_branch
      %23 = sbr.rel (0) target = $region21
    $region20: #{tpu_custom_call.1} parent=1 // pred_region
      _
    $region21: #{tpu_custom_call.1} parent=1 // pred_fallthru
      _
    // Predicated region
    $region22: #{tpu_custom_call.1} parent=1 // pred_check
      _
    $region23: #{tpu_custom_call.1} parent=1 // pred_check_branch
      %25 = sbr.rel (0) target = $region25
    $region24: #{tpu_custom_call.1} parent=1 // pred_region
      _
    $region25: #{tpu_custom_call.1} parent=1 // pred_fallthru
      _
    // Predicated region
    $region26: #{tpu_custom_call.1} parent=1 // pred_check
      _
    $region27: #{tpu_custom_call.1} parent=1 // pred_check_branch
      %27 = sbr.rel (0) target = $region29
    $region28: #{tpu_custom_call.1} parent=1 // pred_region
      _
    $region29: #{tpu_custom_call.1} parent=1 // pred_fallthru
      _
    // Predicated region
    $region30: #{tpu_custom_call.1} parent=1 // pred_check
      _
    $region31: #{tpu_custom_call.1} parent=1 // pred_check_branch
      %29 = sbr.rel (0) target = $region33
    $region32: #{tpu_custom_call.1} parent=1 // pred_region
      _
    $region33: #{tpu_custom_call.1} parent=1 // pred_fallthru
      _
    %v31 = vld [vmem:[%s0] sm:$0x3]
    %v32 = vld [vmem:[%s2] sm:$0xf]
    %v33 = vld [vmem:[%s2 + $0x4] sm:$0xf]
    %v34 = vld [vmem:[%s2 + $0x8] sm:$0xf]
    %v35 = vld [vmem:[%s2 + $0xc] sm:$0xf]
    %v36 = vld [vmem:[%s6] sm:$0xf]
    %v37 = vld [vmem:[%s6 + $0x4] sm:$0xf]
    %v38 = vld [vmem:[%s6 + $0x8] sm:$0xf]
    %v39 = vld [vmem:[%s6 + $0xc] sm:$0xf]
    %v40 = vld [vmem:[%s6 + $0x10] sm:$0xf]
    %v41 = vld [vmem:[%s6 + $0x14] sm:$0xf]
    %v42 = vld [vmem:[%s6 + $0x18] sm:$0xf]
    %v43 = vld [vmem:[%s6 + $0x1c] sm:$0xf]
    %v44 = vld [vmem:[%s6 + $0x20] sm:$0xf]
    %v45 = vld [vmem:[%s6 + $0x24] sm:$0xf]
    %v46 = vld [vmem:[%s6 + $0x28] sm:$0xf]
    %v47 = vld [vmem:[%s6 + $0x2c] sm:$0xf]
    %v48 = vld [vmem:[%s6 + $0x30] sm:$0xf]
    %v49 = vld [vmem:[%s6 + $0x34] sm:$0xf]
    %v50 = vld [vmem:[%s6 + $0x38] sm:$0xf]
    %v51 = vld [vmem:[%s6 + $0x3c] sm:$0xf]
    %v52 = vld [vmem:[%s4] sm:$0x1]
    %v53 = vld [vmem:[%s7] sm:$0x1]
    %v54 = vld [vmem:[%s1] sm:$0x3]
    %v55 = vpack.c.bf16 %v54, %v54
    %v56 = vld [vmem:[%s3] sm:$0xf]
    %v57 = vld [vmem:[%s3 + $0x4] sm:$0xf]
    %v58 = vld [vmem:[%s5] sm:$0x1]
    %v60 = vlaneseq
    %v61 = vshrl.u32 %v60, 7
    %v62 = vsub.s32 0, %v61
    %v63 = vrot.slane %v58, %v62
    %v67 = vunpack.c.l.b16 %v56
    %v68 = vunpack.c.l.b16 %v57
    %v69 = vpack.c.b16 %v68, %v67
    %vm71 = vcmask 130048
    %v73 = vsel %vm71, %v55, 0
    %75 = vmatprep.subr.bf16.mxu0 0
    %76 = vmatpush1.bf16.msra.mxu0 %v69
    %77 = vmatprep.subr.bf16.mxu0 0
    %78 = vmatpush1.bf16.msra.mxu0 0
    %79 = vmatprep.subr.bf16.mxu0 0
    %80 = vmatpush1.bf16.msra.mxu0 0
    %81 = vmatprep.subr.bf16.mxu0 0
    %82 = vmatpush1.bf16.msra.mxu0 0
    %83 = vmatprep.subr.bf16.mxu0 0
    %84 = vmatpush1.bf16.msra.mxu0 0
    %85 = vmatprep.subr.bf16.mxu0 0
    %86 = vmatpush1.bf16.msra.mxu0 0
    %87 = vmatprep.subr.bf16.mxu0 0
    %88 = vmatpush1.bf16.msra.mxu0 0
    %89 = vmatprep.subr.bf16.mxu0 0
    %90 = vmatpush1.bf16.msra.mxu0 0
    %91 = vmatprep.subr.bf16.mxu0 0
    %92 = vmatpush1.bf16.msra.mxu0 0
    %93 = vmatprep.subr.bf16.mxu0 0
    %94 = vmatpush1.bf16.msra.mxu0 0
    %95 = vmatprep.subr.bf16.mxu0 0
    %96 = vmatpush1.bf16.msra.mxu0 0
    %97 = vmatprep.subr.bf16.mxu0 0
    %98 = vmatpush1.bf16.msra.mxu0 0
    %99 = vmatprep.subr.bf16.mxu0 0
    %100 = vmatpush1.bf16.msra.mxu0 0
    %101 = vmatprep.subr.bf16.mxu0 0
    %102 = vmatpush1.bf16.msra.mxu0 0
    %103 = vmatprep.subr.bf16.mxu0 0
    %104 = vmatpush1.bf16.msra.mxu0 0
    %105 = vmatprep.subr.bf16.mxu0 0
    %106 = vmatpush1.bf16.msra.mxu0 0
    %107 = vmatprep.mubr.bf16.mxu0 0
    %108 = vmatmul.mubr.bf16.gmra.mrb[0].mxu0 %v73
    %v109 = vpop.f32.mrb[0].mxu0
    %v110 = vadd.f32 %v63, %v109
    %v111 = vpop.f32.mrb[0].mxu0
    %v112 = vpop.f32.mrb[0].mxu0
    %v113 = vpop.f32.mrb[0].mxu0
    %114 = vdwg.mxu0
    %v115 = vpack.c.bf16 %v31, %v31
    %v120 = vunpack.c.l.b16 %v32
    %v121 = vunpack.c.l.b16 %v33
    %v122 = vunpack.c.l.b16 %v34
    %v123 = vunpack.c.l.b16 %v35
    %v124 = vpack.c.b16 %v121, %v120
    %v125 = vpack.c.b16 %v123, %v122
    %vm128 = vcmask 261120
    %v130 = vsel %vm128, %v115, 0
    %132 = vmatprep.subr.bf16.mxu0 0
    %133 = vmatpush1.bf16.msra.mxu0 %v124
    %134 = vmatprep.subr.bf16.mxu0 0
    %135 = vmatpush1.bf16.msra.mxu0 %v125
    %136 = vmatprep.subr.bf16.mxu0 0
    %137 = vmatpush1.bf16.msra.mxu0 0
    %138 = vmatprep.subr.bf16.mxu0 0
    %139 = vmatpush1.bf16.msra.mxu0 0
    %140 = vmatprep.subr.bf16.mxu0 0
    %141 = vmatpush1.bf16.msra.mxu0 0
    %142 = vmatprep.subr.bf16.mxu0 0
    %143 = vmatpush1.bf16.msra.mxu0 0
    %144 = vmatprep.subr.bf16.mxu0 0
    %145 = vmatpush1.bf16.msra.mxu0 0
    %146 = vmatprep.subr.bf16.mxu0 0
    %147 = vmatpush1.bf16.msra.mxu0 0
    %148 = vmatprep.subr.bf16.mxu0 0
    %149 = vmatpush1.bf16.msra.mxu0 0
    %150 = vmatprep.subr.bf16.mxu0 0
    %151 = vmatpush1.bf16.msra.mxu0 0
    %152 = vmatprep.subr.bf16.mxu0 0
    %153 = vmatpush1.bf16.msra.mxu0 0
    %154 = vmatprep.subr.bf16.mxu0 0
    %155 = vmatpush1.bf16.msra.mxu0 0
    %156 = vmatprep.subr.bf16.mxu0 0
    %157 = vmatpush1.bf16.msra.mxu0 0
    %158 = vmatprep.subr.bf16.mxu0 0
    %159 = vmatpush1.bf16.msra.mxu0 0
    %160 = vmatprep.subr.bf16.mxu0 0
    %161 = vmatpush1.bf16.msra.mxu0 0
    %162 = vmatprep.subr.bf16.mxu0 0
    %163 = vmatpush1.bf16.msra.mxu0 0
    %164 = vmatprep.mubr.bf16.mxu0 0
    %165 = vmatmul.mubr.bf16.gmra.mrb[0].mxu0 %v130
    %v166 = vpop.f32.mrb[0].mxu0
    %v167 = vadd.f32 %v110, %v166
    %v168 = vpop.f32.mrb[0].mxu0
    %v169 = vpop.f32.mrb[0].mxu0
    %v170 = vpop.f32.mrb[0].mxu0
    %171 = vdwg.mxu0
    %v172 = vmul.f32 %v52, 0.0
    %v174 = vlaneseq
    %v175 = vshrl.u32 %v174, 7
    %v176 = vsub.s32 0, %v175
    %v177 = vrot.slane %v172, %v176
    %v179 = vadd.f32 %v167, %v177
    %v180 = vmax.f32 %v179, 0.0
    %v181 = vpack.c.bf16 %v180, %v180
    %v183 = vlaneseq
    %v184 = vshrl.u32 %v183, 7
    %v185 = vsub.s32 0, %v184
    %v186 = vrot.slane %v53, %v185
    %v204 = vunpack.c.l.b16 %v36
    %v205 = vunpack.c.l.b16 %v37
    %v206 = vunpack.c.l.b16 %v38
    %v207 = vunpack.c.l.b16 %v39
    %v208 = vunpack.c.l.b16 %v40
    %v209 = vunpack.c.l.b16 %v41
    %v210 = vunpack.c.l.b16 %v42
    %v211 = vunpack.c.l.b16 %v43
    %v212 = vunpack.c.l.b16 %v44
    %v213 = vunpack.c.l.b16 %v45
    %v214 = vunpack.c.l.b16 %v46
    %v215 = vunpack.c.l.b16 %v47
    %v216 = vunpack.c.l.b16 %v48
    %v217 = vunpack.c.l.b16 %v49
    %v218 = vunpack.c.l.b16 %v50
    %v219 = vunpack.c.l.b16 %v51
    %v220 = vpack.c.b16 %v205, %v204
    %v221 = vpack.c.b16 %v207, %v206
    %v222 = vpack.c.b16 %v209, %v208
    %v223 = vpack.c.b16 %v211, %v210
    %v224 = vpack.c.b16 %v213, %v212
    %v225 = vpack.c.b16 %v215, %v214
    %v226 = vpack.c.b16 %v217, %v216
    %v227 = vpack.c.b16 %v219, %v218
    %236 = vmatprep.subr.bf16.mxu0 0
    %237 = vmatpush1.bf16.msra.mxu0 %v220
    %238 = vmatprep.subr.bf16.mxu0 0
    %239 = vmatpush1.bf16.msra.mxu0 %v221
    %240 = vmatprep.subr.bf16.mxu0 0
    %241 = vmatpush1.bf16.msra.mxu0 %v222
    %242 = vmatprep.subr.bf16.mxu0 0
    %243 = vmatpush1.bf16.msra.mxu0 %v223
    %244 = vmatprep.subr.bf16.mxu0 0
    %245 = vmatpush1.bf16.msra.mxu0 %v224
    %246 = vmatprep.subr.bf16.mxu0 0
    %247 = vmatpush1.bf16.msra.mxu0 %v225
    %248 = vmatprep.subr.bf16.mxu0 0
    %249 = vmatpush1.bf16.msra.mxu0 %v226
    %250 = vmatprep.subr.bf16.mxu0 0
    %251 = vmatpush1.bf16.msra.mxu0 %v227
    %252 = vmatprep.subr.bf16.mxu0 0
    %253 = vmatpush1.bf16.msra.mxu0 0
    %254 = vmatprep.subr.bf16.mxu0 0
    %255 = vmatpush1.bf16.msra.mxu0 0
    %256 = vmatprep.subr.bf16.mxu0 0
    %257 = vmatpush1.bf16.msra.mxu0 0
    %258 = vmatprep.subr.bf16.mxu0 0
    %259 = vmatpush1.bf16.msra.mxu0 0
    %260 = vmatprep.subr.bf16.mxu0 0
    %261 = vmatpush1.bf16.msra.mxu0 0
    %262 = vmatprep.subr.bf16.mxu0 0
    %263 = vmatpush1.bf16.msra.mxu0 0
    %264 = vmatprep.subr.bf16.mxu0 0
    %265 = vmatpush1.bf16.msra.mxu0 0
    %266 = vmatprep.subr.bf16.mxu0 0
    %267 = vmatpush1.bf16.msra.mxu0 0
    %268 = vmatprep.mubr.bf16.mxu0 0
    %269 = vmatmul.mubr.bf16.gmra.mrb[0].mxu0 %v181
    %v270 = vpop.f32.mrb[0].mxu0
    %v271 = vadd.f32 %v186, %v270
    %v272 = vpop.f32.mrb[0].mxu0
    %v273 = vpop.f32.mrb[0].mxu0
    %v274 = vpop.f32.mrb[0].mxu0
    %275 = vdwg.mxu0
    %v276 = vadd.f32 %v31, %v271
    %v277 = vpack.c.bf16 %v276, %v276
    %v279 = vsel %vm128, %v277, 0
    %281 = vmatprep.subr.bf16.mxu0 0
    %282 = vmatpush1.bf16.msra.mxu0 %v124
    %283 = vmatprep.subr.bf16.mxu0 0
    %284 = vmatpush1.bf16.msra.mxu0 %v125
    %285 = vmatprep.subr.bf16.mxu0 0
    %286 = vmatpush1.bf16.msra.mxu0 0
    %287 = vmatprep.subr.bf16.mxu0 0
    %288 = vmatpush1.bf16.msra.mxu0 0
    %289 = vmatprep.subr.bf16.mxu0 0
    %290 = vmatpush1.bf16.msra.mxu0 0
    %291 = vmatprep.subr.bf16.mxu0 0
    %292 = vmatpush1.bf16.msra.mxu0 0
    %293 = vmatprep.subr.bf16.mxu0 0
    %294 = vmatpush1.bf16.msra.mxu0 0
    %295 = vmatprep.subr.bf16.mxu0 0
    %296 = vmatpush1.bf16.msra.mxu0 0
    %297 = vmatprep.subr.bf16.mxu0 0
    %298 = vmatpush1.bf16.msra.mxu0 0
    %299 = vmatprep.subr.bf16.mxu0 0
    %300 = vmatpush1.bf16.msra.mxu0 0
    %301 = vmatprep.subr.bf16.mxu0 0
    %302 = vmatpush1.bf16.msra.mxu0 0
    %303 = vmatprep.subr.bf16.mxu0 0
    %304 = vmatpush1.bf16.msra.mxu0 0
    %305 = vmatprep.subr.bf16.mxu0 0
    %306 = vmatpush1.bf16.msra.mxu0 0
    %307 = vmatprep.subr.bf16.mxu0 0
    %308 = vmatpush1.bf16.msra.mxu0 0
    %309 = vmatprep.subr.bf16.mxu0 0
    %310 = vmatpush1.bf16.msra.mxu0 0
    %311 = vmatprep.subr.bf16.mxu0 0
    %312 = vmatpush1.bf16.msra.mxu0 0
    %313 = vmatprep.mubr.bf16.mxu0 0
    %314 = vmatmul.mubr.bf16.gmra.mrb[0].mxu0 %v279
    %v315 = vpop.f32.mrb[0].mxu0
    %v316 = vadd.f32 %v110, %v315
    %v317 = vpop.f32.mrb[0].mxu0
    %v318 = vpop.f32.mrb[0].mxu0
    %v319 = vpop.f32.mrb[0].mxu0
    %320 = vdwg.mxu0
    %v321 = vmul.f32 %v52, 0.1
    %v323 = vlaneseq
    %v324 = vshrl.u32 %v323, 7
    %v325 = vsub.s32 0, %v324
    %v326 = vrot.slane %v321, %v325
    %v328 = vadd.f32 %v316, %v326
    %v329 = vmax.f32 %v328, 0.0
    %v330 = vpack.c.bf16 %v329, %v329
    %331 = vmatprep.subr.bf16.mxu0 0
    %332 = vmatpush1.bf16.msra.mxu0 %v220
    %333 = vmatprep.subr.bf16.mxu0 0
    %334 = vmatpush1.bf16.msra.mxu0 %v221
    %335 = vmatprep.subr.bf16.mxu0 0
    %336 = vmatpush1.bf16.msra.mxu0 %v222
    %337 = vmatprep.subr.bf16.mxu0 0
    %338 = vmatpush1.bf16.msra.mxu0 %v223
    %339 = vmatprep.subr.bf16.mxu0 0
    %340 = vmatpush1.bf16.msra.mxu0 %v224
    %341 = vmatprep.subr.bf16.mxu0 0
    %342 = vmatpush1.bf16.msra.mxu0 %v225
    %343 = vmatprep.subr.bf16.mxu0 0
    %344 = vmatpush1.bf16.msra.mxu0 %v226
    %345 = vmatprep.subr.bf16.mxu0 0
    %346 = vmatpush1.bf16.msra.mxu0 %v227
    %347 = vmatprep.subr.bf16.mxu0 0
    %348 = vmatpush1.bf16.msra.mxu0 0
    %349 = vmatprep.subr.bf16.mxu0 0
    %350 = vmatpush1.bf16.msra.mxu0 0
    %351 = vmatprep.subr.bf16.mxu0 0
    %352 = vmatpush1.bf16.msra.mxu0 0
    %353 = vmatprep.subr.bf16.mxu0 0
    %354 = vmatpush1.bf16.msra.mxu0 0
    %355 = vmatprep.subr.bf16.mxu0 0
    %356 = vmatpush1.bf16.msra.mxu0 0
    %357 = vmatprep.subr.bf16.mxu0 0
    %358 = vmatpush1.bf16.msra.mxu0 0
    %359 = vmatprep.subr.bf16.mxu0 0
    %360 = vmatpush1.bf16.msra.mxu0 0
    %361 = vmatprep.subr.bf16.mxu0 0
    %362 = vmatpush1.bf16.msra.mxu0 0
    %363 = vmatprep.mubr.bf16.mxu0 0
    %364 = vmatmul.mubr.bf16.gmra.mrb[0].mxu0 %v330
    %v365 = vpop.f32.mrb[0].mxu0
    %v366 = vadd.f32 %v186, %v365
    %v367 = vpop.f32.mrb[0].mxu0
    %v368 = vpop.f32.mrb[0].mxu0
    %v369 = vpop.f32.mrb[0].mxu0
    %370 = vdwg.mxu0
    %v371 = vadd.f32 %v276, %v366
    %v372 = vpack.c.bf16 %v371, %v371
    %v374 = vsel %vm128, %v372, 0
    %376 = vmatprep.subr.bf16.mxu0 0
    %377 = vmatpush1.bf16.msra.mxu0 %v124
    %378 = vmatprep.subr.bf16.mxu0 0
    %379 = vmatpush1.bf16.msra.mxu0 %v125
    %380 = vmatprep.subr.bf16.mxu0 0
    %381 = vmatpush1.bf16.msra.mxu0 0
    %382 = vmatprep.subr.bf16.mxu0 0
    %383 = vmatpush1.bf16.msra.mxu0 0
    %384 = vmatprep.subr.bf16.mxu0 0
    %385 = vmatpush1.bf16.msra.mxu0 0
    %386 = vmatprep.subr.bf16.mxu0 0
    %387 = vmatpush1.bf16.msra.mxu0 0
    %388 = vmatprep.subr.bf16.mxu0 0
    %389 = vmatpush1.bf16.msra.mxu0 0
    %390 = vmatprep.subr.bf16.mxu0 0
    %391 = vmatpush1.bf16.msra.mxu0 0
    %392 = vmatprep.subr.bf16.mxu0 0
    %393 = vmatpush1.bf16.msra.mxu0 0
    %394 = vmatprep.subr.bf16.mxu0 0
    %395 = vmatpush1.bf16.msra.mxu0 0
    %396 = vmatprep.subr.bf16.mxu0 0
    %397 = vmatpush1.bf16.msra.mxu0 0
    %398 = vmatprep.subr.bf16.mxu0 0
    %399 = vmatpush1.bf16.msra.mxu0 0
    %400 = vmatprep.subr.bf16.mxu0 0
    %401 = vmatpush1.bf16.msra.mxu0 0
    %402 = vmatprep.subr.bf16.mxu0 0
    %403 = vmatpush1.bf16.msra.mxu0 0
    %404 = vmatprep.subr.bf16.mxu0 0
    %405 = vmatpush1.bf16.msra.mxu0 0
    %406 = vmatprep.subr.bf16.mxu0 0
    %407 = vmatpush1.bf16.msra.mxu0 0
    %408 = vmatprep.mubr.bf16.mxu0 0
    %409 = vmatmul.mubr.bf16.gmra.mrb[0].mxu0 %v374
    %v410 = vpop.f32.mrb[0].mxu0
    %v411 = vadd.f32 %v110, %v410
    %v412 = vpop.f32.mrb[0].mxu0
    %v413 = vpop.f32.mrb[0].mxu0
    %v414 = vpop.f32.mrb[0].mxu0
    %415 = vdwg.mxu0
    %v416 = vmul.f32 %v52, 0.2
    %v418 = vlaneseq
    %v419 = vshrl.u32 %v418, 7
    %v420 = vsub.s32 0, %v419
    %v421 = vrot.slane %v416, %v420
    %v423 = vadd.f32 %v411, %v421
    %v424 = vmax.f32 %v423, 0.0
    %v425 = vpack.c.bf16 %v424, %v424
    %426 = vmatprep.subr.bf16.mxu0 0
    %427 = vmatpush1.bf16.msra.mxu0 %v220
    %428 = vmatprep.subr.bf16.mxu0 0
    %429 = vmatpush1.bf16.msra.mxu0 %v221
    %430 = vmatprep.subr.bf16.mxu0 0
    %431 = vmatpush1.bf16.msra.mxu0 %v222
    %432 = vmatprep.subr.bf16.mxu0 0
    %433 = vmatpush1.bf16.msra.mxu0 %v223
    %434 = vmatprep.subr.bf16.mxu0 0
    %435 = vmatpush1.bf16.msra.mxu0 %v224
    %436 = vmatprep.subr.bf16.mxu0 0
    %437 = vmatpush1.bf16.msra.mxu0 %v225
    %438 = vmatprep.subr.bf16.mxu0 0
    %439 = vmatpush1.bf16.msra.mxu0 %v226
    %440 = vmatprep.subr.bf16.mxu0 0
    %441 = vmatpush1.bf16.msra.mxu0 %v227
    %442 = vmatprep.subr.bf16.mxu0 0
    %443 = vmatpush1.bf16.msra.mxu0 0
    %444 = vmatprep.subr.bf16.mxu0 0
    %445 = vmatpush1.bf16.msra.mxu0 0
    %446 = vmatprep.subr.bf16.mxu0 0
    %447 = vmatpush1.bf16.msra.mxu0 0
    %448 = vmatprep.subr.bf16.mxu0 0
    %449 = vmatpush1.bf16.msra.mxu0 0
    %450 = vmatprep.subr.bf16.mxu0 0
    %451 = vmatpush1.bf16.msra.mxu0 0
    %452 = vmatprep.subr.bf16.mxu0 0
    %453 = vmatpush1.bf16.msra.mxu0 0
    %454 = vmatprep.subr.bf16.mxu0 0
    %455 = vmatpush1.bf16.msra.mxu0 0
    %456 = vmatprep.subr.bf16.mxu0 0
    %457 = vmatpush1.bf16.msra.mxu0 0
    %458 = vmatprep.mubr.bf16.mxu0 0
    %459 = vmatmul.mubr.bf16.gmra.mrb[0].mxu0 %v425
    %v460 = vpop.f32.mrb[0].mxu0
    %v461 = vadd.f32 %v186, %v460
    %v462 = vpop.f32.mrb[0].mxu0
    %v463 = vpop.f32.mrb[0].mxu0
    %v464 = vpop.f32.mrb[0].mxu0
    %465 = vdwg.mxu0
    %v466 = vadd.f32 %v371, %v461
    %v467 = vpack.c.bf16 %v466, %v466
    %v469 = vsel %vm128, %v467, 0
    %471 = vmatprep.subr.bf16.mxu0 0
    %472 = vmatpush1.bf16.msra.mxu0 %v124
    %473 = vmatprep.subr.bf16.mxu0 0
    %474 = vmatpush1.bf16.msra.mxu0 %v125
    %475 = vmatprep.subr.bf16.mxu0 0
    %476 = vmatpush1.bf16.msra.mxu0 0
    %477 = vmatprep.subr.bf16.mxu0 0
    %478 = vmatpush1.bf16.msra.mxu0 0
    %479 = vmatprep.subr.bf16.mxu0 0
    %480 = vmatpush1.bf16.msra.mxu0 0
    %481 = vmatprep.subr.bf16.mxu0 0
    %482 = vmatpush1.bf16.msra.mxu0 0
    %483 = vmatprep.subr.bf16.mxu0 0
    %484 = vmatpush1.bf16.msra.mxu0 0
    %485 = vmatprep.subr.bf16.mxu0 0
    %486 = vmatpush1.bf16.msra.mxu0 0
    %487 = vmatprep.subr.bf16.mxu0 0
    %488 = vmatpush1.bf16.msra.mxu0 0
    %489 = vmatprep.subr.bf16.mxu0 0
    %490 = vmatpush1.bf16.msra.mxu0 0
    %491 = vmatprep.subr.bf16.mxu0 0
    %492 = vmatpush1.bf16.msra.mxu0 0
    %493 = vmatprep.subr.bf16.mxu0 0
    %494 = vmatpush1.bf16.msra.mxu0 0
    %495 = vmatprep.subr.bf16.mxu0 0
    %496 = vmatpush1.bf16.msra.mxu0 0
    %497 = vmatprep.subr.bf16.mxu0 0
    %498 = vmatpush1.bf16.msra.mxu0 0
    %499 = vmatprep.subr.bf16.mxu0 0
    %500 = vmatpush1.bf16.msra.mxu0 0
    %501 = vmatprep.subr.bf16.mxu0 0
    %502 = vmatpush1.bf16.msra.mxu0 0
    %503 = vmatprep.mubr.bf16.mxu0 0
    %504 = vmatmul.mubr.bf16.gmra.mrb[0].mxu0 %v469
    %v505 = vpop.f32.mrb[0].mxu0
    %v506 = vadd.f32 %v110, %v505
    %v507 = vpop.f32.mrb[0].mxu0
    %v508 = vpop.f32.mrb[0].mxu0
    %v509 = vpop.f32.mrb[0].mxu0
    %510 = vdwg.mxu0
    %v511 = vmul.f32 %v52, 0.3
    %v513 = vlaneseq
    %v514 = vshrl.u32 %v513, 7
    %v515 = vsub.s32 0, %v514
    %v516 = vrot.slane %v511, %v515
    %v518 = vadd.f32 %v506, %v516
    %v519 = vmax.f32 %v518, 0.0
    %v520 = vpack.c.bf16 %v519, %v519
    %521 = vmatprep.subr.bf16.mxu0 0
    %522 = vmatpush1.bf16.msra.mxu0 %v220
    %523 = vmatprep.subr.bf16.mxu0 0
    %524 = vmatpush1.bf16.msra.mxu0 %v221
    %525 = vmatprep.subr.bf16.mxu0 0
    %526 = vmatpush1.bf16.msra.mxu0 %v222
    %527 = vmatprep.subr.bf16.mxu0 0
    %528 = vmatpush1.bf16.msra.mxu0 %v223
    %529 = vmatprep.subr.bf16.mxu0 0
    %530 = vmatpush1.bf16.msra.mxu0 %v224
    %531 = vmatprep.subr.bf16.mxu0 0
    %532 = vmatpush1.bf16.msra.mxu0 %v225
    %533 = vmatprep.subr.bf16.mxu0 0
    %534 = vmatpush1.bf16.msra.mxu0 %v226
    %535 = vmatprep.subr.bf16.mxu0 0
    %536 = vmatpush1.bf16.msra.mxu0 %v227
    %537 = vmatprep.subr.bf16.mxu0 0
    %538 = vmatpush1.bf16.msra.mxu0 0
    %539 = vmatprep.subr.bf16.mxu0 0
    %540 = vmatpush1.bf16.msra.mxu0 0
    %541 = vmatprep.subr.bf16.mxu0 0
    %542 = vmatpush1.bf16.msra.mxu0 0
    %543 = vmatprep.subr.bf16.mxu0 0
    %544 = vmatpush1.bf16.msra.mxu0 0
    %545 = vmatprep.subr.bf16.mxu0 0
    %546 = vmatpush1.bf16.msra.mxu0 0
    %547 = vmatprep.subr.bf16.mxu0 0
    %548 = vmatpush1.bf16.msra.mxu0 0
    %549 = vmatprep.subr.bf16.mxu0 0
    %550 = vmatpush1.bf16.msra.mxu0 0
    %551 = vmatprep.subr.bf16.mxu0 0
    %552 = vmatpush1.bf16.msra.mxu0 0
    %553 = vmatprep.mubr.bf16.mxu0 0
    %554 = vmatmul.mubr.bf16.gmra.mrb[0].mxu0 %v520
    %v555 = vpop.f32.mrb[0].mxu0
    %v556 = vadd.f32 %v186, %v555
    %v557 = vpop.f32.mrb[0].mxu0
    %v558 = vpop.f32.mrb[0].mxu0
    %v559 = vpop.f32.mrb[0].mxu0
    %560 = vdwg.mxu0
    %v561 = vadd.f32 %v466, %v556
    %v562 = vpack.c.bf16 %v561, %v561
    %v564 = vsel %vm128, %v562, 0
    %566 = vmatprep.subr.bf16.mxu0 0
    %567 = vmatpush1.bf16.msra.mxu0 %v124
    %568 = vmatprep.subr.bf16.mxu0 0
    %569 = vmatpush1.bf16.msra.mxu0 %v125
    %570 = vmatprep.subr.bf16.mxu0 0
    %571 = vmatpush1.bf16.msra.mxu0 0
    %572 = vmatprep.subr.bf16.mxu0 0
    %573 = vmatpush1.bf16.msra.mxu0 0
    %574 = vmatprep.subr.bf16.mxu0 0
    %575 = vmatpush1.bf16.msra.mxu0 0
    %576 = vmatprep.subr.bf16.mxu0 0
    %577 = vmatpush1.bf16.msra.mxu0 0
    %578 = vmatprep.subr.bf16.mxu0 0
    %579 = vmatpush1.bf16.msra.mxu0 0
    %580 = vmatprep.subr.bf16.mxu0 0
    %581 = vmatpush1.bf16.msra.mxu0 0
    %582 = vmatprep.subr.bf16.mxu0 0
    %583 = vmatpush1.bf16.msra.mxu0 0
    %584 = vmatprep.subr.bf16.mxu0 0
    %585 = vmatpush1.bf16.msra.mxu0 0
    %586 = vmatprep.subr.bf16.mxu0 0
    %587 = vmatpush1.bf16.msra.mxu0 0
    %588 = vmatprep.subr.bf16.mxu0 0
    %589 = vmatpush1.bf16.msra.mxu0 0
    %590 = vmatprep.subr.bf16.mxu0 0
    %591 = vmatpush1.bf16.msra.mxu0 0
    %592 = vmatprep.subr.bf16.mxu0 0
    %593 = vmatpush1.bf16.msra.mxu0 0
    %594 = vmatprep.subr.bf16.mxu0 0
    %595 = vmatpush1.bf16.msra.mxu0 0
    %596 = vmatprep.subr.bf16.mxu0 0
    %597 = vmatpush1.bf16.msra.mxu0 0
    %598 = vmatprep.mubr.bf16.mxu0 0
    %599 = vmatmul.mubr.bf16.gmra.mrb[0].mxu0 %v564
    %v600 = vpop.f32.mrb[0].mxu0
    %v601 = vadd.f32 %v110, %v600
    %v602 = vpop.f32.mrb[0].mxu0
    %v603 = vpop.f32.mrb[0].mxu0
    %v604 = vpop.f32.mrb[0].mxu0
    %605 = vdwg.mxu0
    %v606 = vmul.f32 %v52, 0.4
    %v608 = vlaneseq
    %v609 = vshrl.u32 %v608, 7
    %v610 = vsub.s32 0, %v609
    %v611 = vrot.slane %v606, %v610
    %v613 = vadd.f32 %v601, %v611
    %v614 = vmax.f32 %v613, 0.0
    %v615 = vpack.c.bf16 %v614, %v614
    %616 = vmatprep.subr.bf16.mxu0 0
    %617 = vmatpush1.bf16.msra.mxu0 %v220
    %618 = vmatprep.subr.bf16.mxu0 0
    %619 = vmatpush1.bf16.msra.mxu0 %v221
    %620 = vmatprep.subr.bf16.mxu0 0
    %621 = vmatpush1.bf16.msra.mxu0 %v222
    %622 = vmatprep.subr.bf16.mxu0 0
    %623 = vmatpush1.bf16.msra.mxu0 %v223
    %624 = vmatprep.subr.bf16.mxu0 0
    %625 = vmatpush1.bf16.msra.mxu0 %v224
    %626 = vmatprep.subr.bf16.mxu0 0
    %627 = vmatpush1.bf16.msra.mxu0 %v225
    %628 = vmatprep.subr.bf16.mxu0 0
    %629 = vmatpush1.bf16.msra.mxu0 %v226
    %630 = vmatprep.subr.bf16.mxu0 0
    %631 = vmatpush1.bf16.msra.mxu0 %v227
    %632 = vmatprep.subr.bf16.mxu0 0
    %633 = vmatpush1.bf16.msra.mxu0 0
    %634 = vmatprep.subr.bf16.mxu0 0
    %635 = vmatpush1.bf16.msra.mxu0 0
    %636 = vmatprep.subr.bf16.mxu0 0
    %637 = vmatpush1.bf16.msra.mxu0 0
    %638 = vmatprep.subr.bf16.mxu0 0
    %639 = vmatpush1.bf16.msra.mxu0 0
    %640 = vmatprep.subr.bf16.mxu0 0
    %641 = vmatpush1.bf16.msra.mxu0 0
    %642 = vmatprep.subr.bf16.mxu0 0
    %643 = vmatpush1.bf16.msra.mxu0 0
    %644 = vmatprep.subr.bf16.mxu0 0
    %645 = vmatpush1.bf16.msra.mxu0 0
    %646 = vmatprep.subr.bf16.mxu0 0
    %647 = vmatpush1.bf16.msra.mxu0 0
    %648 = vmatprep.mubr.bf16.mxu0 0
    %649 = vmatmul.mubr.bf16.gmra.mrb[0].mxu0 %v615
    %v650 = vpop.f32.mrb[0].mxu0
    %v651 = vadd.f32 %v186, %v650
    %v652 = vpop.f32.mrb[0].mxu0
    %v653 = vpop.f32.mrb[0].mxu0
    %v654 = vpop.f32.mrb[0].mxu0
    %655 = vdwg.mxu0
    %v656 = vadd.f32 %v561, %v651
    %v657 = vpack.c.bf16 %v656, %v656
    %v659 = vsel %vm128, %v657, 0
    %661 = vmatprep.subr.bf16.mxu0 0
    %662 = vmatpush1.bf16.msra.mxu0 %v124
    %663 = vmatprep.subr.bf16.mxu0 0
    %664 = vmatpush1.bf16.msra.mxu0 %v125
    %665 = vmatprep.subr.bf16.mxu0 0
    %666 = vmatpush1.bf16.msra.mxu0 0
    %667 = vmatprep.subr.bf16.mxu0 0
    %668 = vmatpush1.bf16.msra.mxu0 0
    %669 = vmatprep.subr.bf16.mxu0 0
    %670 = vmatpush1.bf16.msra.mxu0 0
    %671 = vmatprep.subr.bf16.mxu0 0
    %672 = vmatpush1.bf16.msra.mxu0 0
    %673 = vmatprep.subr.bf16.mxu0 0
    %674 = vmatpush1.bf16.msra.mxu0 0
    %675 = vmatprep.subr.bf16.mxu0 0
    %676 = vmatpush1.bf16.msra.mxu0 0
    %677 = vmatprep.subr.bf16.mxu0 0
    %678 = vmatpush1.bf16.msra.mxu0 0
    %679 = vmatprep.subr.bf16.mxu0 0
    %680 = vmatpush1.bf16.msra.mxu0 0
    %681 = vmatprep.subr.bf16.mxu0 0
    %682 = vmatpush1.bf16.msra.mxu0 0
    %683 = vmatprep.subr.bf16.mxu0 0
    %684 = vmatpush1.bf16.msra.mxu0 0
    %685 = vmatprep.subr.bf16.mxu0 0
    %686 = vmatpush1.bf16.msra.mxu0 0
    %687 = vmatprep.subr.bf16.mxu0 0
    %688 = vmatpush1.bf16.msra.mxu0 0
    %689 = vmatprep.subr.bf16.mxu0 0
    %690 = vmatpush1.bf16.msra.mxu0 0
    %691 = vmatprep.subr.bf16.mxu0 0
    %692 = vmatpush1.bf16.msra.mxu0 0
    %693 = vmatprep.mubr.bf16.mxu0 0
    %694 = vmatmul.mubr.bf16.gmra.mrb[0].mxu0 %v659
    %v695 = vpop.f32.mrb[0].mxu0
    %v696 = vadd.f32 %v110, %v695
    %v697 = vpop.f32.mrb[0].mxu0
    %v698 = vpop.f32.mrb[0].mxu0
    %v699 = vpop.f32.mrb[0].mxu0
    %700 = vdwg.mxu0
    %v701 = vmul.f32 %v52, 0.5
    %v703 = vlaneseq
    %v704 = vshrl.u32 %v703, 7
    %v705 = vsub.s32 0, %v704
    %v706 = vrot.slane %v701, %v705
    %v708 = vadd.f32 %v696, %v706
    %v709 = vmax.f32 %v708, 0.0
    %v710 = vpack.c.bf16 %v709, %v709
    %711 = vmatprep.subr.bf16.mxu0 0
    %712 = vmatpush1.bf16.msra.mxu0 %v220
    %713 = vmatprep.subr.bf16.mxu0 0
    %714 = vmatpush1.bf16.msra.mxu0 %v221
    %715 = vmatprep.subr.bf16.mxu0 0
    %716 = vmatpush1.bf16.msra.mxu0 %v222
    %717 = vmatprep.subr.bf16.mxu0 0
    %718 = vmatpush1.bf16.msra.mxu0 %v223
    %719 = vmatprep.subr.bf16.mxu0 0
    %720 = vmatpush1.bf16.msra.mxu0 %v224
    %721 = vmatprep.subr.bf16.mxu0 0
    %722 = vmatpush1.bf16.msra.mxu0 %v225
    %723 = vmatprep.subr.bf16.mxu0 0
    %724 = vmatpush1.bf16.msra.mxu0 %v226
    %725 = vmatprep.subr.bf16.mxu0 0
    %726 = vmatpush1.bf16.msra.mxu0 %v227
    %727 = vmatprep.subr.bf16.mxu0 0
    %728 = vmatpush1.bf16.msra.mxu0 0
    %729 = vmatprep.subr.bf16.mxu0 0
    %730 = vmatpush1.bf16.msra.mxu0 0
    %731 = vmatprep.subr.bf16.mxu0 0
    %732 = vmatpush1.bf16.msra.mxu0 0
    %733 = vmatprep.subr.bf16.mxu0 0
    %734 = vmatpush1.bf16.msra.mxu0 0
    %735 = vmatprep.subr.bf16.mxu0 0
    %736 = vmatpush1.bf16.msra.mxu0 0
    %737 = vmatprep.subr.bf16.mxu0 0
    %738 = vmatpush1.bf16.msra.mxu0 0
    %739 = vmatprep.subr.bf16.mxu0 0
    %740 = vmatpush1.bf16.msra.mxu0 0
    %741 = vmatprep.subr.bf16.mxu0 0
    %742 = vmatpush1.bf16.msra.mxu0 0
    %743 = vmatprep.mubr.bf16.mxu0 0
    %744 = vmatmul.mubr.bf16.gmra.mrb[0].mxu0 %v710
    %v745 = vpop.f32.mrb[0].mxu0
    %v746 = vadd.f32 %v186, %v745
    %v747 = vpop.f32.mrb[0].mxu0
    %v748 = vpop.f32.mrb[0].mxu0
    %v749 = vpop.f32.mrb[0].mxu0
    %750 = vdwg.mxu0
    %v751 = vadd.f32 %v656, %v746
    %v752 = vpack.c.bf16 %v751, %v751
    %v754 = vsel %vm128, %v752, 0
    %756 = vmatprep.subr.bf16.mxu0 0
    %757 = vmatpush1.bf16.msra.mxu0 %v124
    %758 = vmatprep.subr.bf16.mxu0 0
    %759 = vmatpush1.bf16.msra.mxu0 %v125
    %760 = vmatprep.subr.bf16.mxu0 0
    %761 = vmatpush1.bf16.msra.mxu0 0
    %762 = vmatprep.subr.bf16.mxu0 0
    %763 = vmatpush1.bf16.msra.mxu0 0
    %764 = vmatprep.subr.bf16.mxu0 0
    %765 = vmatpush1.bf16.msra.mxu0 0
    %766 = vmatprep.subr.bf16.mxu0 0
    %767 = vmatpush1.bf16.msra.mxu0 0
    %768 = vmatprep.subr.bf16.mxu0 0
    %769 = vmatpush1.bf16.msra.mxu0 0
    %770 = vmatprep.subr.bf16.mxu0 0
    %771 = vmatpush1.bf16.msra.mxu0 0
    %772 = vmatprep.subr.bf16.mxu0 0
    %773 = vmatpush1.bf16.msra.mxu0 0
    %774 = vmatprep.subr.bf16.mxu0 0
    %775 = vmatpush1.bf16.msra.mxu0 0
    %776 = vmatprep.subr.bf16.mxu0 0
    %777 = vmatpush1.bf16.msra.mxu0 0
    %778 = vmatprep.subr.bf16.mxu0 0
    %779 = vmatpush1.bf16.msra.mxu0 0
    %780 = vmatprep.subr.bf16.mxu0 0
    %781 = vmatpush1.bf16.msra.mxu0 0
    %782 = vmatprep.subr.bf16.mxu0 0
    %783 = vmatpush1.bf16.msra.mxu0 0
    %784 = vmatprep.subr.bf16.mxu0 0
    %785 = vmatpush1.bf16.msra.mxu0 0
    %786 = vmatprep.subr.bf16.mxu0 0
    %787 = vmatpush1.bf16.msra.mxu0 0
    %788 = vmatprep.mubr.bf16.mxu0 0
    %789 = vmatmul.mubr.bf16.gmra.mrb[0].mxu0 %v754
    %v790 = vpop.f32.mrb[0].mxu0
    %v791 = vadd.f32 %v110, %v790
    %v792 = vpop.f32.mrb[0].mxu0
    %v793 = vpop.f32.mrb[0].mxu0
    %v794 = vpop.f32.mrb[0].mxu0
    %795 = vdwg.mxu0
    %v796 = vmul.f32 %v52, 0.6
    %v798 = vlaneseq
    %v799 = vshrl.u32 %v798, 7
    %v800 = vsub.s32 0, %v799
    %v801 = vrot.slane %v796, %v800
    %v803 = vadd.f32 %v791, %v801
    %v804 = vmax.f32 %v803, 0.0
    %v805 = vpack.c.bf16 %v804, %v804
    %806 = vmatprep.subr.bf16.mxu0 0
    %807 = vmatpush1.bf16.msra.mxu0 %v220
    %808 = vmatprep.subr.bf16.mxu0 0
    %809 = vmatpush1.bf16.msra.mxu0 %v221
    %810 = vmatprep.subr.bf16.mxu0 0
    %811 = vmatpush1.bf16.msra.mxu0 %v222
    %812 = vmatprep.subr.bf16.mxu0 0
    %813 = vmatpush1.bf16.msra.mxu0 %v223
    %814 = vmatprep.subr.bf16.mxu0 0
    %815 = vmatpush1.bf16.msra.mxu0 %v224
    %816 = vmatprep.subr.bf16.mxu0 0
    %817 = vmatpush1.bf16.msra.mxu0 %v225
    %818 = vmatprep.subr.bf16.mxu0 0
    %819 = vmatpush1.bf16.msra.mxu0 %v226
    %820 = vmatprep.subr.bf16.mxu0 0
    %821 = vmatpush1.bf16.msra.mxu0 %v227
    %822 = vmatprep.subr.bf16.mxu0 0
    %823 = vmatpush1.bf16.msra.mxu0 0
    %824 = vmatprep.subr.bf16.mxu0 0
    %825 = vmatpush1.bf16.msra.mxu0 0
    %826 = vmatprep.subr.bf16.mxu0 0
    %827 = vmatpush1.bf16.msra.mxu0 0
    %828 = vmatprep.subr.bf16.mxu0 0
    %829 = vmatpush1.bf16.msra.mxu0 0
    %830 = vmatprep.subr.bf16.mxu0 0
    %831 = vmatpush1.bf16.msra.mxu0 0
    %832 = vmatprep.subr.bf16.mxu0 0
    %833 = vmatpush1.bf16.msra.mxu0 0
    %834 = vmatprep.subr.bf16.mxu0 0
    %835 = vmatpush1.bf16.msra.mxu0 0
    %836 = vmatprep.subr.bf16.mxu0 0
    %837 = vmatpush1.bf16.msra.mxu0 0
    %838 = vmatprep.mubr.bf16.mxu0 0
    %839 = vmatmul.mubr.bf16.gmra.mrb[0].mxu0 %v805
    %v840 = vpop.f32.mrb[0].mxu0
    %v841 = vadd.f32 %v186, %v840
    %v842 = vpop.f32.mrb[0].mxu0
    %v843 = vpop.f32.mrb[0].mxu0
    %v844 = vpop.f32.mrb[0].mxu0
    %845 = vdwg.mxu0
    %v846 = vadd.f32 %v751, %v841
    %v847 = vpack.c.bf16 %v846, %v846
    %v849 = vsel %vm128, %v847, 0
    %851 = vmatprep.subr.bf16.mxu0 0
    %852 = vmatpush1.bf16.msra.mxu0 %v124
    %853 = vmatprep.subr.bf16.mxu0 0
    %854 = vmatpush1.bf16.msra.mxu0 %v125
    %855 = vmatprep.subr.bf16.mxu0 0
    %856 = vmatpush1.bf16.msra.mxu0 0
    %857 = vmatprep.subr.bf16.mxu0 0
    %858 = vmatpush1.bf16.msra.mxu0 0
    %859 = vmatprep.subr.bf16.mxu0 0
    %860 = vmatpush1.bf16.msra.mxu0 0
    %861 = vmatprep.subr.bf16.mxu0 0
    %862 = vmatpush1.bf16.msra.mxu0 0
    %863 = vmatprep.subr.bf16.mxu0 0
    %864 = vmatpush1.bf16.msra.mxu0 0
    %865 = vmatprep.subr.bf16.mxu0 0
    %866 = vmatpush1.bf16.msra.mxu0 0
    %867 = vmatprep.subr.bf16.mxu0 0
    %868 = vmatpush1.bf16.msra.mxu0 0
    %869 = vmatprep.subr.bf16.mxu0 0
    %870 = vmatpush1.bf16.msra.mxu0 0
    %871 = vmatprep.subr.bf16.mxu0 0
    %872 = vmatpush1.bf16.msra.mxu0 0
    %873 = vmatprep.subr.bf16.mxu0 0
    %874 = vmatpush1.bf16.msra.mxu0 0
    %875 = vmatprep.subr.bf16.mxu0 0
    %876 = vmatpush1.bf16.msra.mxu0 0
    %877 = vmatprep.subr.bf16.mxu0 0
    %878 = vmatpush1.bf16.msra.mxu0 0
    %879 = vmatprep.subr.bf16.mxu0 0
    %880 = vmatpush1.bf16.msra.mxu0 0
    %881 = vmatprep.subr.bf16.mxu0 0
    %882 = vmatpush1.bf16.msra.mxu0 0
    %883 = vmatprep.mubr.bf16.mxu0 0
    %884 = vmatmul.mubr.bf16.gmra.mrb[0].mxu0 %v849
    %v885 = vpop.f32.mrb[0].mxu0
    %v886 = vadd.f32 %v110, %v885
    %v887 = vpop.f32.mrb[0].mxu0
    %v888 = vpop.f32.mrb[0].mxu0
    %v889 = vpop.f32.mrb[0].mxu0
    %890 = vdwg.mxu0
    %v891 = vmul.f32 %v52, 0.7
    %v893 = vlaneseq
    %v894 = vshrl.u32 %v893, 7
    %v895 = vsub.s32 0, %v894
    %v896 = vrot.slane %v891, %v895
    %v898 = vadd.f32 %v886, %v896
    %v899 = vmax.f32 %v898, 0.0
    %v900 = vpack.c.bf16 %v899, %v899
    %901 = vmatprep.subr.bf16.mxu0 0
    %902 = vmatpush1.bf16.msra.mxu0 %v220
    %903 = vmatprep.subr.bf16.mxu0 0
    %904 = vmatpush1.bf16.msra.mxu0 %v221
    %905 = vmatprep.subr.bf16.mxu0 0
    %906 = vmatpush1.bf16.msra.mxu0 %v222
    %907 = vmatprep.subr.bf16.mxu0 0
    %908 = vmatpush1.bf16.msra.mxu0 %v223
    %909 = vmatprep.subr.bf16.mxu0 0
    %910 = vmatpush1.bf16.msra.mxu0 %v224
    %911 = vmatprep.subr.bf16.mxu0 0
    %912 = vmatpush1.bf16.msra.mxu0 %v225
    %913 = vmatprep.subr.bf16.mxu0 0
    %914 = vmatpush1.bf16.msra.mxu0 %v226
    %915 = vmatprep.subr.bf16.mxu0 0
    %916 = vmatpush1.bf16.msra.mxu0 %v227
    %917 = vmatprep.subr.bf16.mxu0 0
    %918 = vmatpush1.bf16.msra.mxu0 0
    %919 = vmatprep.subr.bf16.mxu0 0
    %920 = vmatpush1.bf16.msra.mxu0 0
    %921 = vmatprep.subr.bf16.mxu0 0
    %922 = vmatpush1.bf16.msra.mxu0 0
    %923 = vmatprep.subr.bf16.mxu0 0
    %924 = vmatpush1.bf16.msra.mxu0 0
    %925 = vmatprep.subr.bf16.mxu0 0
    %926 = vmatpush1.bf16.msra.mxu0 0
    %927 = vmatprep.subr.bf16.mxu0 0
    %928 = vmatpush1.bf16.msra.mxu0 0
    %929 = vmatprep.subr.bf16.mxu0 0
    %930 = vmatpush1.bf16.msra.mxu0 0
    %931 = vmatprep.subr.bf16.mxu0 0
    %932 = vmatpush1.bf16.msra.mxu0 0
    %933 = vmatprep.mubr.bf16.mxu0 0
    %934 = vmatmul.mubr.bf16.gmra.mrb[0].mxu0 %v900
    %v935 = vpop.f32.mrb[0].mxu0
    %v936 = vadd.f32 %v186, %v935
    %v937 = vpop.f32.mrb[0].mxu0
    %v938 = vpop.f32.mrb[0].mxu0
    %v939 = vpop.f32.mrb[0].mxu0
    %940 = vdwg.mxu0
    %v941 = vadd.f32 %v846, %v936
    %v942 = vpack.c.bf16 %v941, %v941
    %v944 = vsel %vm128, %v942, 0
    %946 = vmatprep.subr.bf16.mxu0 0
    %947 = vmatpush1.bf16.msra.mxu0 %v124
    %948 = vmatprep.subr.bf16.mxu0 0
    %949 = vmatpush1.bf16.msra.mxu0 %v125
    %950 = vmatprep.subr.bf16.mxu0 0
    %951 = vmatpush1.bf16.msra.mxu0 0
    %952 = vmatprep.subr.bf16.mxu0 0
    %953 = vmatpush1.bf16.msra.mxu0 0
    %954 = vmatprep.subr.bf16.mxu0 0
    %955 = vmatpush1.bf16.msra.mxu0 0
    %956 = vmatprep.subr.bf16.mxu0 0
    %957 = vmatpush1.bf16.msra.mxu0 0
    %958 = vmatprep.subr.bf16.mxu0 0
    %959 = vmatpush1.bf16.msra.mxu0 0
    %960 = vmatprep.subr.bf16.mxu0 0
    %961 = vmatpush1.bf16.msra.mxu0 0
    %962 = vmatprep.subr.bf16.mxu0 0
    %963 = vmatpush1.bf16.msra.mxu0 0
    %964 = vmatprep.subr.bf16.mxu0 0
    %965 = vmatpush1.bf16.msra.mxu0 0
    %966 = vmatprep.subr.bf16.mxu0 0
    %967 = vmatpush1.bf16.msra.mxu0 0
    %968 = vmatprep.subr.bf16.mxu0 0
    %969 = vmatpush1.bf16.msra.mxu0 0
    %970 = vmatprep.subr.bf16.mxu0 0
    %971 = vmatpush1.bf16.msra.mxu0 0
    %972 = vmatprep.subr.bf16.mxu0 0
    %973 = vmatpush1.bf16.msra.mxu0 0
    %974 = vmatprep.subr.bf16.mxu0 0
    %975 = vmatpush1.bf16.msra.mxu0 0
    %976 = vmatprep.subr.bf16.mxu0 0
    %977 = vmatpush1.bf16.msra.mxu0 0
    %978 = vmatprep.mubr.bf16.mxu0 0
    %979 = vmatmul.mubr.bf16.gmra.mrb[0].mxu0 %v944
    %v980 = vpop.f32.mrb[0].mxu0
    %v981 = vadd.f32 %v110, %v980
    %v982 = vpop.f32.mrb[0].mxu0
    %v983 = vpop.f32.mrb[0].mxu0
    %v984 = vpop.f32.mrb[0].mxu0
    %985 = vdwg.mxu0
    %v986 = vmul.f32 %v52, 0.8
    %v988 = vlaneseq
    %v989 = vshrl.u32 %v988, 7
    %v990 = vsub.s32 0, %v989
    %v991 = vrot.slane %v986, %v990
    %v993 = vadd.f32 %v981, %v991
    %v994 = vmax.f32 %v993, 0.0
    %v995 = vpack.c.bf16 %v994, %v994
    %996 = vmatprep.subr.bf16.mxu0 0
    %997 = vmatpush1.bf16.msra.mxu0 %v220
    %998 = vmatprep.subr.bf16.mxu0 0
    %999 = vmatpush1.bf16.msra.mxu0 %v221
    %1000 = vmatprep.subr.bf16.mxu0 0
    %1001 = vmatpush1.bf16.msra.mxu0 %v222
    %1002 = vmatprep.subr.bf16.mxu0 0
    %1003 = vmatpush1.bf16.msra.mxu0 %v223
    %1004 = vmatprep.subr.bf16.mxu0 0
    %1005 = vmatpush1.bf16.msra.mxu0 %v224
    %1006 = vmatprep.subr.bf16.mxu0 0
    %1007 = vmatpush1.bf16.msra.mxu0 %v225
    %1008 = vmatprep.subr.bf16.mxu0 0
    %1009 = vmatpush1.bf16.msra.mxu0 %v226
    %1010 = vmatprep.subr.bf16.mxu0 0
    %1011 = vmatpush1.bf16.msra.mxu0 %v227
    %1012 = vmatprep.subr.bf16.mxu0 0
    %1013 = vmatpush1.bf16.msra.mxu0 0
    %1014 = vmatprep.subr.bf16.mxu0 0
    %1015 = vmatpush1.bf16.msra.mxu0 0
    %1016 = vmatprep.subr.bf16.mxu0 0
    %1017 = vmatpush1.bf16.msra.mxu0 0
    %1018 = vmatprep.subr.bf16.mxu0 0
    %1019 = vmatpush1.bf16.msra.mxu0 0
    %1020 = vmatprep.subr.bf16.mxu0 0
    %1021 = vmatpush1.bf16.msra.mxu0 0
    %1022 = vmatprep.subr.bf16.mxu0 0
    %1023 = vmatpush1.bf16.msra.mxu0 0
    %1024 = vmatprep.subr.bf16.mxu0 0
    %1025 = vmatpush1.bf16.msra.mxu0 0
    %1026 = vmatprep.subr.bf16.mxu0 0
    %1027 = vmatpush1.bf16.msra.mxu0 0
    %1028 = vmatprep.mubr.bf16.mxu0 0
    %1029 = vmatmul.mubr.bf16.gmra.mrb[0].mxu0 %v995
    %v1030 = vpop.f32.mrb[0].mxu0
    %v1031 = vadd.f32 %v186, %v1030
    %v1032 = vpop.f32.mrb[0].mxu0
    %v1033 = vpop.f32.mrb[0].mxu0
    %v1034 = vpop.f32.mrb[0].mxu0
    %1035 = vdwg.mxu0
    %v1036 = vadd.f32 %v941, %v1031
    %v1037 = vpack.c.bf16 %v1036, %v1036
    %v1039 = vsel %vm128, %v1037, 0
    %1041 = vmatprep.subr.bf16.mxu0 0
    %1042 = vmatpush1.bf16.msra.mxu0 %v124
    %1043 = vmatprep.subr.bf16.mxu0 0
    %1044 = vmatpush1.bf16.msra.mxu0 %v125
    %1045 = vmatprep.subr.bf16.mxu0 0
    %1046 = vmatpush1.bf16.msra.mxu0 0
    %1047 = vmatprep.subr.bf16.mxu0 0
    %1048 = vmatpush1.bf16.msra.mxu0 0
    %1049 = vmatprep.subr.bf16.mxu0 0
    %1050 = vmatpush1.bf16.msra.mxu0 0
    %1051 = vmatprep.subr.bf16.mxu0 0
    %1052 = vmatpush1.bf16.msra.mxu0 0
    %1053 = vmatprep.subr.bf16.mxu0 0
    %1054 = vmatpush1.bf16.msra.mxu0 0
    %1055 = vmatprep.subr.bf16.mxu0 0
    %1056 = vmatpush1.bf16.msra.mxu0 0
    %1057 = vmatprep.subr.bf16.mxu0 0
    %1058 = vmatpush1.bf16.msra.mxu0 0
    %1059 = vmatprep.subr.bf16.mxu0 0
    %1060 = vmatpush1.bf16.msra.mxu0 0
    %1061 = vmatprep.subr.bf16.mxu0 0
    %1062 = vmatpush1.bf16.msra.mxu0 0
    %1063 = vmatprep.subr.bf16.mxu0 0
    %1064 = vmatpush1.bf16.msra.mxu0 0
    %1065 = vmatprep.subr.bf16.mxu0 0
    %1066 = vmatpush1.bf16.msra.mxu0 0
    %1067 = vmatprep.subr.bf16.mxu0 0
    %1068 = vmatpush1.bf16.msra.mxu0 0
    %1069 = vmatprep.subr.bf16.mxu0 0
    %1070 = vmatpush1.bf16.msra.mxu0 0
    %1071 = vmatprep.subr.bf16.mxu0 0
    %1072 = vmatpush1.bf16.msra.mxu0 0
    %1073 = vmatprep.mubr.bf16.mxu0 0
    %1074 = vmatmul.mubr.bf16.gmra.mrb[0].mxu0 %v1039
    %v1075 = vpop.f32.mrb[0].mxu0
    %v1076 = vadd.f32 %v110, %v1075
    %v1077 = vpop.f32.mrb[0].mxu0
    %v1078 = vpop.f32.mrb[0].mxu0
    %v1079 = vpop.f32.mrb[0].mxu0
    %1080 = vdwg.mxu0
    %v1081 = vmul.f32 %v52, 0.9
    %v1083 = vlaneseq
    %v1084 = vshrl.u32 %v1083, 7
    %v1085 = vsub.s32 0, %v1084
    %v1086 = vrot.slane %v1081, %v1085
    %v1088 = vadd.f32 %v1076, %v1086
    %v1089 = vmax.f32 %v1088, 0.0
    %v1090 = vpack.c.bf16 %v1089, %v1089
    %1091 = vmatprep.subr.bf16.mxu0 0
    %1092 = vmatpush1.bf16.msra.mxu0 %v220
    %1093 = vmatprep.subr.bf16.mxu0 0
    %1094 = vmatpush1.bf16.msra.mxu0 %v221
    %1095 = vmatprep.subr.bf16.mxu0 0
    %1096 = vmatpush1.bf16.msra.mxu0 %v222
    %1097 = vmatprep.subr.bf16.mxu0 0
    %1098 = vmatpush1.bf16.msra.mxu0 %v223
    %1099 = vmatprep.subr.bf16.mxu0 0
    %1100 = vmatpush1.bf16.msra.mxu0 %v224
    %1101 = vmatprep.subr.bf16.mxu0 0
    %1102 = vmatpush1.bf16.msra.mxu0 %v225
    %1103 = vmatprep.subr.bf16.mxu0 0
    %1104 = vmatpush1.bf16.msra.mxu0 %v226
    %1105 = vmatprep.subr.bf16.mxu0 0
    %1106 = vmatpush1.bf16.msra.mxu0 %v227
    %1107 = vmatprep.subr.bf16.mxu0 0
    %1108 = vmatpush1.bf16.msra.mxu0 0
    %1109 = vmatprep.subr.bf16.mxu0 0
    %1110 = vmatpush1.bf16.msra.mxu0 0
    %1111 = vmatprep.subr.bf16.mxu0 0
    %1112 = vmatpush1.bf16.msra.mxu0 0
    %1113 = vmatprep.subr.bf16.mxu0 0
    %1114 = vmatpush1.bf16.msra.mxu0 0
    %1115 = vmatprep.subr.bf16.mxu0 0
    %1116 = vmatpush1.bf16.msra.mxu0 0
    %1117 = vmatprep.subr.bf16.mxu0 0
    %1118 = vmatpush1.bf16.msra.mxu0 0
    %1119 = vmatprep.subr.bf16.mxu0 0
    %1120 = vmatpush1.bf16.msra.mxu0 0
    %1121 = vmatprep.subr.bf16.mxu0 0
    %1122 = vmatpush1.bf16.msra.mxu0 0
    %1123 = vmatprep.mubr.bf16.mxu0 0
    %1124 = vmatmul.mubr.bf16.gmra.mrb[0].mxu0 %v1090
    %v1125 = vpop.f32.mrb[0].mxu0
    %v1126 = vadd.f32 %v186, %v1125
    %v1127 = vpop.f32.mrb[0].mxu0
    %v1128 = vpop.f32.mrb[0].mxu0
    %v1129 = vpop.f32.mrb[0].mxu0
    %1130 = vdwg.mxu0
    %v1131 = vadd.f32 %v1036, %v1126
    %v1132 = vmax.f32 %v1131, -1.0
    %v1133 = vmin.f32 %v1132, 1.0
    %vm1134 = vcmask 254976
    %1135 = vst.msk [vmem:[#allocation2] sm:$0x3] %vm1134, %v1133
    // Predicated region
    $region34: #{tpu_custom_call.1} parent=1 // pred_check
      _
    $region35: #{tpu_custom_call.1} parent=1 // pred_check_branch
      %1137 = sbr.rel (0) target = $region37
    $region36: #{tpu_custom_call.1} parent=1 // pred_region
      %s1139 = ssub.s32 32, 32
      %1140 = vsyncadd [#allocation3], %s1139
      %s1142 = sshll.u32 [#allocation2], 4
      %s1143 = int_to_ptr.vmem [resolvable:$true] %s1142
      %1145 = dma.vmem_to_hbm [thread:$0]  %s1143, 32, %s8, [#allocation3]
    $region37: #{tpu_custom_call.1} parent=1 // pred_fallthru
      _
    // Predicated region
    $region38: #{tpu_custom_call.1} parent=1 // pred_check
      _
    $region39: #{tpu_custom_call.1} parent=1 // pred_check_branch
      %1147 = sbr.rel (0) target = $region41
    $region40: #{tpu_custom_call.1} parent=1 // pred_region
      %1148 = dma.done [#allocation3], 32
    $region41: #{tpu_custom_call.1} parent=1 // pred_fallthru
      _
    %1149 = vsyncpa [#allocation3], 1

</llo_original>
